<compile_context>
chip_gen: v5e
topology: v5e:2x2
jax: 0.10.0
libtpu: 0.0.40
codegen_flags: <defaults>
</compile_context>

<pallas_src>
import jax
import jax.numpy as jnp
import numpy as np
from jax import lax
from jax.experimental import pallas as pl
from jax.experimental.pallas import tpu as pltpu

VOCAB_SIZE = 32
EMBED_DIM = 64
HIDDEN_DIM = 128
BATCH = 2
SEQ = 8

B_PAD = 8      # pad batch to one full sublane group
V_PAD = 128    # pad vocab logits to one full lane group (unmasked vst)
K_PAD = 128    # pad one-hot contraction dim to one full lane group


# ---------------------------------------------------------------------------
# Pallas kernel: fused one-hot gather of the precomputed (emb @ W_ih^T + bias)
# table + LSTM recurrence + final Linear, all in one invocation.
# ---------------------------------------------------------------------------
def lstm_fc_kernel(ids_ref, proj_ref, whh_ref, wfc_ref, bfc_ref, out_ref, gx_ref):
    TB = ids_ref.shape[0]            # T * B_PAD
    K = proj_ref.shape[0]            # K_PAD (lane-dense padded vocab)
    H = whh_ref.shape[0]
    T = TB // B_PAD

    # --- Fused embedding lookup + input projection + bias, hoisted out of the
    # serial chain.  proj already holds emb @ W_ih^T + (b_ih + b_hh), rows
    # >= VOCAB_SIZE are zero, so gx = one_hot(ids) @ proj directly.
    onehot = (ids_ref[...] ==
              lax.broadcasted_iota(jnp.int32, (TB, K), 1)).astype(jnp.float32)  # (TB, K)
    gx_ref[...] = jnp.dot(onehot, proj_ref[...],
                          preferred_element_type=jnp.float32)                   # (TB, 4H)

    h0 = jnp.zeros((B_PAD, H), jnp.float32)
    c0 = jnp.zeros((B_PAD, H), jnp.float32)

    def step(t, carry):
        h, c = carry
        row = pl.multiple_of(t * B_PAD, B_PAD)
        gx = gx_ref[pl.ds(row, B_PAD), :]                                   # (B_PAD, 4H)
        gates = gx + jnp.dot(h, whh_ref[...],
                             preferred_element_type=jnp.float32)            # (B_PAD, 4H)
        # PyTorch LSTM gate order: i, f, g, o (lane-aligned slices at k*H)
        i_g = jax.nn.sigmoid(gates[:, 0 * H:1 * H])
        f_g = jax.nn.sigmoid(gates[:, 1 * H:2 * H])
        g_g = jnp.tanh(gates[:, 2 * H:3 * H])
        o_g = jax.nn.sigmoid(gates[:, 3 * H:4 * H])
        c_new = f_g * c + i_g * g_g
        h_new = o_g * jnp.tanh(c_new)
        return (h_new, c_new)

    # T is static and tiny -> fully unroll so the scheduler can overlap the
    # recurrent MXU push with the previous step's gate EUP/VPU work.
    h_last, _ = lax.fori_loop(0, T, step, (h0, c0), unroll=True)

    # Lane-dense (B_PAD, V_PAD) store; real logits sliced out in the wrapper.
    out_ref[...] = (jnp.dot(h_last, wfc_ref[...],
                            preferred_element_type=jnp.float32)
                    + bfc_ref[...])


# ---------------------------------------------------------------------------
# One-time parameter layout prep (NOT paid per forward call).
# ---------------------------------------------------------------------------
def prepare_params(params):
    # Fold embedding, input projection and the combined LSTM bias into a single
    # (K_PAD, 4H) table.  Valid because every (clipped) id produces a one-hot
    # row summing to exactly 1.
    proj = (params["embedding"] @ params["w_ih"].T
            + (params["b_ih"] + params["b_hh"])[None, :])                  # (V, 4H)
    proj_pad = jnp.zeros((K_PAD, 4 * HIDDEN_DIM), jnp.float32).at[:VOCAB_SIZE, :].set(proj)

    w_fc_t = params["w_fc"].T                                              # (H, V)
    w_fc_pad = jnp.zeros((HIDDEN_DIM, V_PAD), jnp.float32).at[:, :VOCAB_SIZE].set(w_fc_t)
    b_fc_pad = jnp.zeros((1, V_PAD), jnp.float32).at[:, :VOCAB_SIZE].set(params["b_fc"])
    return {
        "proj": proj_pad,                                                  # (K_PAD, 4H)
        "w_hh_t": params["w_hh"].T,                                        # (H, 4H)
        "w_fc_t": w_fc_pad,                                                # (H, V_PAD)
        "b_fc": b_fc_pad,                                                  # (1, V_PAD)
    }


# ---------------------------------------------------------------------------
# Forward wrapper: only tiny int32 id plumbing outside the kernel.
# ---------------------------------------------------------------------------
@jax.jit
def simple_llm_forward(x_tokens, kparams):
    B, T = x_tokens.shape

    # Build ids directly time-major (T, B_PAD); the row-major reshape to
    # (T*B_PAD, 1) is free.  Clip guarantees the one-hot/bias-fold invariant.
    ids = jnp.zeros((T, B_PAD), jnp.int32).at[:, :B].set(
        jnp.clip(x_tokens, 0, VOCAB_SIZE - 1).astype(jnp.int32).T)
    ids = ids.reshape(T * B_PAD, 1)

    cost = pl.CostEstimate(flops=17_000_000, transcendentals=50_000,
                           bytes_accessed=600_000)

    vmem = pl.BlockSpec(memory_space=pltpu.MemorySpace.VMEM)
    out = pl.pallas_call(
        lstm_fc_kernel,
        out_shape=jax.ShapeDtypeStruct((B_PAD, V_PAD), jnp.float32),
        in_specs=[vmem] * 5,
        out_specs=vmem,
        scratch_shapes=[pltpu.VMEM((T * B_PAD, 4 * HIDDEN_DIM), jnp.float32)],
        cost_estimate=cost,
    )(ids, kparams["proj"], kparams["w_hh_t"], kparams["w_fc_t"], kparams["b_fc"])

    return out[:B, :VOCAB_SIZE]


# ---------------------------------------------------------------------------
# Pure-JAX reference (mirrors torch semantics) for correctness.
# ---------------------------------------------------------------------------
def reference_forward(x_tokens, params):
    H = HIDDEN_DIM
    embedded = jnp.take(params["embedding"], x_tokens, axis=0)  # (B, T, E)
    B = x_tokens.shape[0]
    h = jnp.zeros((B, H), jnp.float32)
    c = jnp.zeros((B, H), jnp.float32)

    def step(carry, x_t):
        h, c = carry
        gates = (x_t @ params["w_ih"].T + params["b_ih"]
                 + h @ params["w_hh"].T + params["b_hh"])
        i_g = jax.nn.sigmoid(gates[:, 0 * H:1 * H])
        f_g = jax.nn.sigmoid(gates[:, 1 * H:2 * H])
        g_g = jnp.tanh(gates[:, 2 * H:3 * H])
        o_g = jax.nn.sigmoid(gates[:, 3 * H:4 * H])
        c_new = f_g * c + i_g * g_g
        h_new = o_g * jnp.tanh(c_new)
        return (h_new, c_new), None

    (h, c), _ = lax.scan(step, (h, c), jnp.transpose(embedded, (1, 0, 2)))
    return h @ params["w_fc"].T + params["b_fc"]


def init_params(key):
    ks = jax.random.split(key, 7)
    s = 0.1
    return {
        "embedding": s * jax.random.normal(ks[0], (VOCAB_SIZE, EMBED_DIM), jnp.float32),
        "w_ih": s * jax.random.normal(ks[1], (4 * HIDDEN_DIM, EMBED_DIM), jnp.float32),
        "w_hh": s * jax.random.normal(ks[2], (4 * HIDDEN_DIM, HIDDEN_DIM), jnp.float32),
        "b_ih": s * jax.random.normal(ks[3], (4 * HIDDEN_DIM,), jnp.float32),
        "b_hh": s * jax.random.normal(ks[4], (4 * HIDDEN_DIM,), jnp.float32),
        "w_fc": s * jax.random.normal(ks[5], (VOCAB_SIZE, HIDDEN_DIM), jnp.float32),
        "b_fc": s * jax.random.normal(ks[6], (VOCAB_SIZE,), jnp.float32),
    }


if __name__ == "__main__":
    key = jax.random.PRNGKey(0)
    pkey, xkey = jax.random.split(key)
    params = init_params(pkey)
    kparams = prepare_params(params)   # one-time layout prep
    x = jax.random.randint(xkey, (BATCH, SEQ), 0, VOCAB_SIZE, dtype=jnp.int32)

    out = jax.block_until_ready(simple_llm_forward(x, kparams))
    ref = jax.block_until_ready(reference_forward(x, params))
    np.testing.assert_allclose(np.asarray(out), np.asarray(ref), rtol=1e-4, atol=1e-4)

    print("KERNEL_OK")
</pallas_src>

<mosaic_0001>
module attributes {stable_mosaic.version = 11 : i64} {
  func.func @lstm_fc_kernel(%arg0: memref<64x1xi32, #tpu.memory_space<vmem>>, %arg1: memref<128x512xf32, #tpu.memory_space<vmem>>, %arg2: memref<128x512xf32, #tpu.memory_space<vmem>>, %arg3: memref<128x128xf32, #tpu.memory_space<vmem>>, %arg4: memref<1x128xf32, #tpu.memory_space<vmem>>, %arg5: memref<8x128xf32, #tpu.memory_space<vmem>>, %arg6: memref<64x512xf32, #tpu.memory_space<vmem>>) attributes {dimension_semantics = [], scalar_prefetch = 0 : i64, scratch_operands = 1 : i64, tpu.core_type = #tpu.core_type<tc>} {
    %c0 = arith.constant 0 : index
    %c0_0 = arith.constant 0 : index
    %0 = vector.load %arg0[%c0, %c0_0] : memref<64x1xi32, #tpu.memory_space<vmem>>, vector<64x1xi32>
    %1 = tpu.iota {dimensions = array<i32: 1>} : vector<64x128xi32>
    %2 = vector.broadcast %0 : vector<64x1xi32> to vector<64x128xi32>
    %3 = arith.cmpi eq, %2, %1 : vector<64x128xi32>
    %4 = arith.extui %3 : vector<64x128xi1> to vector<64x128xi32>
    %5 = arith.sitofp %4 : vector<64x128xi32> to vector<64x128xf32>
    %c0_1 = arith.constant 0 : index
    %c0_2 = arith.constant 0 : index
    %6 = vector.load %arg1[%c0_1, %c0_2] : memref<128x512xf32, #tpu.memory_space<vmem>>, vector<128x512xf32>
    %cst = arith.constant dense<0.000000e+00> : vector<64x512xf32>
    %7 = tpu.matmul %5, %6, %cst {dimension_numbers = #tpu.dot_dimension_numbers<[1], [0], [0], [1], [0, 0, 1, 1], [], []>} : vector<64x128xf32>, vector<128x512xf32>, vector<64x512xf32> -> vector<64x512xf32>
    %c0_3 = arith.constant 0 : index
    %c0_4 = arith.constant 0 : index
    %8 = vector.load %arg6[%c0_3, %c0_4] : memref<64x512xf32, #tpu.memory_space<vmem>>, vector<64x512xf32>
    tpu.vector_store %arg6[%c0_3, %c0_4], %7 {strides = array<i32>} : memref<64x512xf32, #tpu.memory_space<vmem>>, vector<64x512xf32>,
    %cst_5 = arith.constant 0.000000e+00 : f32
    %9 = vector.broadcast %cst_5 : f32 to vector<8x128xf32>
    %cst_6 = arith.constant 0.000000e+00 : f32
    %10 = vector.broadcast %cst_6 : f32 to vector<8x128xf32>
    %c0_i32 = arith.constant 0 : i32
    %c8_i32 = arith.constant 8 : i32
    %11 = arith.muli %c0_i32, %c8_i32 : i32
    %12 = tpu.assume_multiple %11, 8 : i32
    %13 = arith.index_cast %12 : i32 to index
    %c0_7 = arith.constant 0 : index
    %14 = vector.load %arg6[%13, %c0_7] : memref<64x512xf32, #tpu.memory_space<vmem>>, vector<8x512xf32>
    %c0_8 = arith.constant 0 : index
    %c0_9 = arith.constant 0 : index
    %15 = vector.load %arg2[%c0_8, %c0_9] : memref<128x512xf32, #tpu.memory_space<vmem>>, vector<128x512xf32>
    %cst_10 = arith.constant dense<0.000000e+00> : vector<8x512xf32>
    %16 = tpu.matmul %9, %15, %cst_10 {dimension_numbers = #tpu.dot_dimension_numbers<[1], [0], [0], [1], [0, 0, 1, 1], [], []>} : vector<8x128xf32>, vector<128x512xf32>, vector<8x512xf32> -> vector<8x512xf32>
    %17 = arith.addf %14, %16 : vector<8x512xf32>
    %18 = vector.extract_strided_slice %17 {offsets = [0, 0], sizes = [8, 128], strides = [1, 1]} : vector<8x512xf32> to vector<8x128xf32>
    %19 = arith.negf %18 : vector<8x128xf32>
    %20 = math.exp %19 : vector<8x128xf32>
    %cst_11 = arith.constant 1.000000e+00 : f32
    %21 = vector.broadcast %cst_11 : f32 to vector<8x128xf32>
    %22 = arith.addf %21, %20 : vector<8x128xf32>
    %23 = arith.divf %21, %22 : vector<8x128xf32>
    %24 = vector.extract_strided_slice %17 {offsets = [0, 128], sizes = [8, 128], strides = [1, 1]} : vector<8x512xf32> to vector<8x128xf32>
    %25 = arith.negf %24 : vector<8x128xf32>
    %26 = math.exp %25 : vector<8x128xf32>
    %cst_12 = arith.constant 1.000000e+00 : f32
    %27 = vector.broadcast %cst_12 : f32 to vector<8x128xf32>
    %28 = arith.addf %27, %26 : vector<8x128xf32>
    %29 = arith.divf %27, %28 : vector<8x128xf32>
    %30 = vector.extract_strided_slice %17 {offsets = [0, 256], sizes = [8, 128], strides = [1, 1]} : vector<8x512xf32> to vector<8x128xf32>
    %31 = math.tanh %30 : vector<8x128xf32>
    %32 = vector.extract_strided_slice %17 {offsets = [0, 384], sizes = [8, 128], strides = [1, 1]} : vector<8x512xf32> to vector<8x128xf32>
    %33 = arith.negf %32 : vector<8x128xf32>
    %34 = math.exp %33 : vector<8x128xf32>
    %cst_13 = arith.constant 1.000000e+00 : f32
    %35 = vector.broadcast %cst_13 : f32 to vector<8x128xf32>
    %36 = arith.addf %35, %34 : vector<8x128xf32>
    %37 = arith.divf %35, %36 : vector<8x128xf32>
    %38 = arith.mulf %29, %10 : vector<8x128xf32>
    %39 = arith.mulf %23, %31 : vector<8x128xf32>
    %40 = arith.addf %38, %39 : vector<8x128xf32>
    %41 = math.tanh %40 : vector<8x128xf32>
    %42 = arith.mulf %37, %41 : vector<8x128xf32>
    %c1_i32 = arith.constant 1 : i32
    %c8_i32_14 = arith.constant 8 : i32
    %43 = arith.muli %c1_i32, %c8_i32_14 : i32
    %44 = tpu.assume_multiple %43, 8 : i32
    %45 = arith.index_cast %44 : i32 to index
    %c0_15 = arith.constant 0 : index
    %46 = vector.load %arg6[%45, %c0_15] : memref<64x512xf32, #tpu.memory_space<vmem>>, vector<8x512xf32>
    %c0_16 = arith.constant 0 : index
    %c0_17 = arith.constant 0 : index
    %47 = vector.load %arg2[%c0_16, %c0_17] : memref<128x512xf32, #tpu.memory_space<vmem>>, vector<128x512xf32>
    %cst_18 = arith.constant dense<0.000000e+00> : vector<8x512xf32>
    %48 = tpu.matmul %42, %47, %cst_18 {dimension_numbers = #tpu.dot_dimension_numbers<[1], [0], [0], [1], [0, 0, 1, 1], [], []>} : vector<8x128xf32>, vector<128x512xf32>, vector<8x512xf32> -> vector<8x512xf32>
    %49 = arith.addf %46, %48 : vector<8x512xf32>
    %50 = vector.extract_strided_slice %49 {offsets = [0, 0], sizes = [8, 128], strides = [1, 1]} : vector<8x512xf32> to vector<8x128xf32>
    %51 = arith.negf %50 : vector<8x128xf32>
    %52 = math.exp %51 : vector<8x128xf32>
    %cst_19 = arith.constant 1.000000e+00 : f32
    %53 = vector.broadcast %cst_19 : f32 to vector<8x128xf32>
    %54 = arith.addf %53, %52 : vector<8x128xf32>
    %55 = arith.divf %53, %54 : vector<8x128xf32>
    %56 = vector.extract_strided_slice %49 {offsets = [0, 128], sizes = [8, 128], strides = [1, 1]} : vector<8x512xf32> to vector<8x128xf32>
    %57 = arith.negf %56 : vector<8x128xf32>
    %58 = math.exp %57 : vector<8x128xf32>
    %cst_20 = arith.constant 1.000000e+00 : f32
    %59 = vector.broadcast %cst_20 : f32 to vector<8x128xf32>
    %60 = arith.addf %59, %58 : vector<8x128xf32>
    %61 = arith.divf %59, %60 : vector<8x128xf32>
    %62 = vector.extract_strided_slice %49 {offsets = [0, 256], sizes = [8, 128], strides = [1, 1]} : vector<8x512xf32> to vector<8x128xf32>
    %63 = math.tanh %62 : vector<8x128xf32>
    %64 = vector.extract_strided_slice %49 {offsets = [0, 384], sizes = [8, 128], strides = [1, 1]} : vector<8x512xf32> to vector<8x128xf32>
    %65 = arith.negf %64 : vector<8x128xf32>
    %66 = math.exp %65 : vector<8x128xf32>
    %cst_21 = arith.constant 1.000000e+00 : f32
    %67 = vector.broadcast %cst_21 : f32 to vector<8x128xf32>
    %68 = arith.addf %67, %66 : vector<8x128xf32>
    %69 = arith.divf %67, %68 : vector<8x128xf32>
    %70 = arith.mulf %61, %40 : vector<8x128xf32>
    %71 = arith.mulf %55, %63 : vector<8x128xf32>
    %72 = arith.addf %70, %71 : vector<8x128xf32>
    %73 = math.tanh %72 : vector<8x128xf32>
    %74 = arith.mulf %69, %73 : vector<8x128xf32>
    %c2_i32 = arith.constant 2 : i32
    %c8_i32_22 = arith.constant 8 : i32
    %75 = arith.muli %c2_i32, %c8_i32_22 : i32
    %76 = tpu.assume_multiple %75, 8 : i32
    %77 = arith.index_cast %76 : i32 to index
    %c0_23 = arith.constant 0 : index
    %78 = vector.load %arg6[%77, %c0_23] : memref<64x512xf32, #tpu.memory_space<vmem>>, vector<8x512xf32>
    %c0_24 = arith.constant 0 : index
    %c0_25 = arith.constant 0 : index
    %79 = vector.load %arg2[%c0_24, %c0_25] : memref<128x512xf32, #tpu.memory_space<vmem>>, vector<128x512xf32>
    %cst_26 = arith.constant dense<0.000000e+00> : vector<8x512xf32>
    %80 = tpu.matmul %74, %79, %cst_26 {dimension_numbers = #tpu.dot_dimension_numbers<[1], [0], [0], [1], [0, 0, 1, 1], [], []>} : vector<8x128xf32>, vector<128x512xf32>, vector<8x512xf32> -> vector<8x512xf32>
    %81 = arith.addf %78, %80 : vector<8x512xf32>
    %82 = vector.extract_strided_slice %81 {offsets = [0, 0], sizes = [8, 128], strides = [1, 1]} : vector<8x512xf32> to vector<8x128xf32>
    %83 = arith.negf %82 : vector<8x128xf32>
    %84 = math.exp %83 : vector<8x128xf32>
    %cst_27 = arith.constant 1.000000e+00 : f32
    %85 = vector.broadcast %cst_27 : f32 to vector<8x128xf32>
    %86 = arith.addf %85, %84 : vector<8x128xf32>
    %87 = arith.divf %85, %86 : vector<8x128xf32>
    %88 = vector.extract_strided_slice %81 {offsets = [0, 128], sizes = [8, 128], strides = [1, 1]} : vector<8x512xf32> to vector<8x128xf32>
    %89 = arith.negf %88 : vector<8x128xf32>
    %90 = math.exp %89 : vector<8x128xf32>
    %cst_28 = arith.constant 1.000000e+00 : f32
    %91 = vector.broadcast %cst_28 : f32 to vector<8x128xf32>
    %92 = arith.addf %91, %90 : vector<8x128xf32>
    %93 = arith.divf %91, %92 : vector<8x128xf32>
    %94 = vector.extract_strided_slice %81 {offsets = [0, 256], sizes = [8, 128], strides = [1, 1]} : vector<8x512xf32> to vector<8x128xf32>
    %95 = math.tanh %94 : vector<8x128xf32>
    %96 = vector.extract_strided_slice %81 {offsets = [0, 384], sizes = [8, 128], strides = [1, 1]} : vector<8x512xf32> to vector<8x128xf32>
    %97 = arith.negf %96 : vector<8x128xf32>
    %98 = math.exp %97 : vector<8x128xf32>
    %cst_29 = arith.constant 1.000000e+00 : f32
    %99 = vector.broadcast %cst_29 : f32 to vector<8x128xf32>
    %100 = arith.addf %99, %98 : vector<8x128xf32>
    %101 = arith.divf %99, %100 : vector<8x128xf32>
    %102 = arith.mulf %93, %72 : vector<8x128xf32>
    %103 = arith.mulf %87, %95 : vector<8x128xf32>
    %104 = arith.addf %102, %103 : vector<8x128xf32>
    %105 = math.tanh %104 : vector<8x128xf32>
    %106 = arith.mulf %101, %105 : vector<8x128xf32>
    %c3_i32 = arith.constant 3 : i32
    %c8_i32_30 = arith.constant 8 : i32
    %107 = arith.muli %c3_i32, %c8_i32_30 : i32
    %108 = tpu.assume_multiple %107, 8 : i32
    %109 = arith.index_cast %108 : i32 to index
    %c0_31 = arith.constant 0 : index
    %110 = vector.load %arg6[%109, %c0_31] : memref<64x512xf32, #tpu.memory_space<vmem>>, vector<8x512xf32>
    %c0_32 = arith.constant 0 : index
    %c0_33 = arith.constant 0 : index
    %111 = vector.load %arg2[%c0_32, %c0_33] : memref<128x512xf32, #tpu.memory_space<vmem>>, vector<128x512xf32>
    %cst_34 = arith.constant dense<0.000000e+00> : vector<8x512xf32>
    %112 = tpu.matmul %106, %111, %cst_34 {dimension_numbers = #tpu.dot_dimension_numbers<[1], [0], [0], [1], [0, 0, 1, 1], [], []>} : vector<8x128xf32>, vector<128x512xf32>, vector<8x512xf32> -> vector<8x512xf32>
    %113 = arith.addf %110, %112 : vector<8x512xf32>
    %114 = vector.extract_strided_slice %113 {offsets = [0, 0], sizes = [8, 128], strides = [1, 1]} : vector<8x512xf32> to vector<8x128xf32>
    %115 = arith.negf %114 : vector<8x128xf32>
    %116 = math.exp %115 : vector<8x128xf32>
    %cst_35 = arith.constant 1.000000e+00 : f32
    %117 = vector.broadcast %cst_35 : f32 to vector<8x128xf32>
    %118 = arith.addf %117, %116 : vector<8x128xf32>
    %119 = arith.divf %117, %118 : vector<8x128xf32>
    %120 = vector.extract_strided_slice %113 {offsets = [0, 128], sizes = [8, 128], strides = [1, 1]} : vector<8x512xf32> to vector<8x128xf32>
    %121 = arith.negf %120 : vector<8x128xf32>
    %122 = math.exp %121 : vector<8x128xf32>
    %cst_36 = arith.constant 1.000000e+00 : f32
    %123 = vector.broadcast %cst_36 : f32 to vector<8x128xf32>
    %124 = arith.addf %123, %122 : vector<8x128xf32>
    %125 = arith.divf %123, %124 : vector<8x128xf32>
    %126 = vector.extract_strided_slice %113 {offsets = [0, 256], sizes = [8, 128], strides = [1, 1]} : vector<8x512xf32> to vector<8x128xf32>
    %127 = math.tanh %126 : vector<8x128xf32>
    %128 = vector.extract_strided_slice %113 {offsets = [0, 384], sizes = [8, 128], strides = [1, 1]} : vector<8x512xf32> to vector<8x128xf32>
    %129 = arith.negf %128 : vector<8x128xf32>
    %130 = math.exp %129 : vector<8x128xf32>
    %cst_37 = arith.constant 1.000000e+00 : f32
    %131 = vector.broadcast %cst_37 : f32 to vector<8x128xf32>
    %132 = arith.addf %131, %130 : vector<8x128xf32>
    %133 = arith.divf %131, %132 : vector<8x128xf32>
    %134 = arith.mulf %125, %104 : vector<8x128xf32>
    %135 = arith.mulf %119, %127 : vector<8x128xf32>
    %136 = arith.addf %134, %135 : vector<8x128xf32>
    %137 = math.tanh %136 : vector<8x128xf32>
    %138 = arith.mulf %133, %137 : vector<8x128xf32>
    %c4_i32 = arith.constant 4 : i32
    %c8_i32_38 = arith.constant 8 : i32
    %139 = arith.muli %c4_i32, %c8_i32_38 : i32
    %140 = tpu.assume_multiple %139, 8 : i32
    %141 = arith.index_cast %140 : i32 to index
    %c0_39 = arith.constant 0 : index
    %142 = vector.load %arg6[%141, %c0_39] : memref<64x512xf32, #tpu.memory_space<vmem>>, vector<8x512xf32>
    %c0_40 = arith.constant 0 : index
    %c0_41 = arith.constant 0 : index
    %143 = vector.load %arg2[%c0_40, %c0_41] : memref<128x512xf32, #tpu.memory_space<vmem>>, vector<128x512xf32>
    %cst_42 = arith.constant dense<0.000000e+00> : vector<8x512xf32>
    %144 = tpu.matmul %138, %143, %cst_42 {dimension_numbers = #tpu.dot_dimension_numbers<[1], [0], [0], [1], [0, 0, 1, 1], [], []>} : vector<8x128xf32>, vector<128x512xf32>, vector<8x512xf32> -> vector<8x512xf32>
    %145 = arith.addf %142, %144 : vector<8x512xf32>
    %146 = vector.extract_strided_slice %145 {offsets = [0, 0], sizes = [8, 128], strides = [1, 1]} : vector<8x512xf32> to vector<8x128xf32>
    %147 = arith.negf %146 : vector<8x128xf32>
    %148 = math.exp %147 : vector<8x128xf32>
    %cst_43 = arith.constant 1.000000e+00 : f32
    %149 = vector.broadcast %cst_43 : f32 to vector<8x128xf32>
    %150 = arith.addf %149, %148 : vector<8x128xf32>
    %151 = arith.divf %149, %150 : vector<8x128xf32>
    %152 = vector.extract_strided_slice %145 {offsets = [0, 128], sizes = [8, 128], strides = [1, 1]} : vector<8x512xf32> to vector<8x128xf32>
    %153 = arith.negf %152 : vector<8x128xf32>
    %154 = math.exp %153 : vector<8x128xf32>
    %cst_44 = arith.constant 1.000000e+00 : f32
    %155 = vector.broadcast %cst_44 : f32 to vector<8x128xf32>
    %156 = arith.addf %155, %154 : vector<8x128xf32>
    %157 = arith.divf %155, %156 : vector<8x128xf32>
    %158 = vector.extract_strided_slice %145 {offsets = [0, 256], sizes = [8, 128], strides = [1, 1]} : vector<8x512xf32> to vector<8x128xf32>
    %159 = math.tanh %158 : vector<8x128xf32>
    %160 = vector.extract_strided_slice %145 {offsets = [0, 384], sizes = [8, 128], strides = [1, 1]} : vector<8x512xf32> to vector<8x128xf32>
    %161 = arith.negf %160 : vector<8x128xf32>
    %162 = math.exp %161 : vector<8x128xf32>
    %cst_45 = arith.constant 1.000000e+00 : f32
    %163 = vector.broadcast %cst_45 : f32 to vector<8x128xf32>
    %164 = arith.addf %163, %162 : vector<8x128xf32>
    %165 = arith.divf %163, %164 : vector<8x128xf32>
    %166 = arith.mulf %157, %136 : vector<8x128xf32>
    %167 = arith.mulf %151, %159 : vector<8x128xf32>
    %168 = arith.addf %166, %167 : vector<8x128xf32>
    %169 = math.tanh %168 : vector<8x128xf32>
    %170 = arith.mulf %165, %169 : vector<8x128xf32>
    %c5_i32 = arith.constant 5 : i32
    %c8_i32_46 = arith.constant 8 : i32
    %171 = arith.muli %c5_i32, %c8_i32_46 : i32
    %172 = tpu.assume_multiple %171, 8 : i32
    %173 = arith.index_cast %172 : i32 to index
    %c0_47 = arith.constant 0 : index
    %174 = vector.load %arg6[%173, %c0_47] : memref<64x512xf32, #tpu.memory_space<vmem>>, vector<8x512xf32>
    %c0_48 = arith.constant 0 : index
    %c0_49 = arith.constant 0 : index
    %175 = vector.load %arg2[%c0_48, %c0_49] : memref<128x512xf32, #tpu.memory_space<vmem>>, vector<128x512xf32>
    %cst_50 = arith.constant dense<0.000000e+00> : vector<8x512xf32>
    %176 = tpu.matmul %170, %175, %cst_50 {dimension_numbers = #tpu.dot_dimension_numbers<[1], [0], [0], [1], [0, 0, 1, 1], [], []>} : vector<8x128xf32>, vector<128x512xf32>, vector<8x512xf32> -> vector<8x512xf32>
    %177 = arith.addf %174, %176 : vector<8x512xf32>
    %178 = vector.extract_strided_slice %177 {offsets = [0, 0], sizes = [8, 128], strides = [1, 1]} : vector<8x512xf32> to vector<8x128xf32>
    %179 = arith.negf %178 : vector<8x128xf32>
    %180 = math.exp %179 : vector<8x128xf32>
    %cst_51 = arith.constant 1.000000e+00 : f32
    %181 = vector.broadcast %cst_51 : f32 to vector<8x128xf32>
    %182 = arith.addf %181, %180 : vector<8x128xf32>
    %183 = arith.divf %181, %182 : vector<8x128xf32>
    %184 = vector.extract_strided_slice %177 {offsets = [0, 128], sizes = [8, 128], strides = [1, 1]} : vector<8x512xf32> to vector<8x128xf32>
    %185 = arith.negf %184 : vector<8x128xf32>
    %186 = math.exp %185 : vector<8x128xf32>
    %cst_52 = arith.constant 1.000000e+00 : f32
    %187 = vector.broadcast %cst_52 : f32 to vector<8x128xf32>
    %188 = arith.addf %187, %186 : vector<8x128xf32>
    %189 = arith.divf %187, %188 : vector<8x128xf32>
    %190 = vector.extract_strided_slice %177 {offsets = [0, 256], sizes = [8, 128], strides = [1, 1]} : vector<8x512xf32> to vector<8x128xf32>
    %191 = math.tanh %190 : vector<8x128xf32>
    %192 = vector.extract_strided_slice %177 {offsets = [0, 384], sizes = [8, 128], strides = [1, 1]} : vector<8x512xf32> to vector<8x128xf32>
    %193 = arith.negf %192 : vector<8x128xf32>
    %194 = math.exp %193 : vector<8x128xf32>
    %cst_53 = arith.constant 1.000000e+00 : f32
    %195 = vector.broadcast %cst_53 : f32 to vector<8x128xf32>
    %196 = arith.addf %195, %194 : vector<8x128xf32>
    %197 = arith.divf %195, %196 : vector<8x128xf32>
    %198 = arith.mulf %189, %168 : vector<8x128xf32>
    %199 = arith.mulf %183, %191 : vector<8x128xf32>
    %200 = arith.addf %198, %199 : vector<8x128xf32>
    %201 = math.tanh %200 : vector<8x128xf32>
    %202 = arith.mulf %197, %201 : vector<8x128xf32>
    %c6_i32 = arith.constant 6 : i32
    %c8_i32_54 = arith.constant 8 : i32
    %203 = arith.muli %c6_i32, %c8_i32_54 : i32
    %204 = tpu.assume_multiple %203, 8 : i32
    %205 = arith.index_cast %204 : i32 to index
    %c0_55 = arith.constant 0 : index
    %206 = vector.load %arg6[%205, %c0_55] : memref<64x512xf32, #tpu.memory_space<vmem>>, vector<8x512xf32>
    %c0_56 = arith.constant 0 : index
    %c0_57 = arith.constant 0 : index
    %207 = vector.load %arg2[%c0_56, %c0_57] : memref<128x512xf32, #tpu.memory_space<vmem>>, vector<128x512xf32>
    %cst_58 = arith.constant dense<0.000000e+00> : vector<8x512xf32>
    %208 = tpu.matmul %202, %207, %cst_58 {dimension_numbers = #tpu.dot_dimension_numbers<[1], [0], [0], [1], [0, 0, 1, 1], [], []>} : vector<8x128xf32>, vector<128x512xf32>, vector<8x512xf32> -> vector<8x512xf32>
    %209 = arith.addf %206, %208 : vector<8x512xf32>
    %210 = vector.extract_strided_slice %209 {offsets = [0, 0], sizes = [8, 128], strides = [1, 1]} : vector<8x512xf32> to vector<8x128xf32>
    %211 = arith.negf %210 : vector<8x128xf32>
    %212 = math.exp %211 : vector<8x128xf32>
    %cst_59 = arith.constant 1.000000e+00 : f32
    %213 = vector.broadcast %cst_59 : f32 to vector<8x128xf32>
    %214 = arith.addf %213, %212 : vector<8x128xf32>
    %215 = arith.divf %213, %214 : vector<8x128xf32>
    %216 = vector.extract_strided_slice %209 {offsets = [0, 128], sizes = [8, 128], strides = [1, 1]} : vector<8x512xf32> to vector<8x128xf32>
    %217 = arith.negf %216 : vector<8x128xf32>
    %218 = math.exp %217 : vector<8x128xf32>
    %cst_60 = arith.constant 1.000000e+00 : f32
    %219 = vector.broadcast %cst_60 : f32 to vector<8x128xf32>
    %220 = arith.addf %219, %218 : vector<8x128xf32>
    %221 = arith.divf %219, %220 : vector<8x128xf32>
    %222 = vector.extract_strided_slice %209 {offsets = [0, 256], sizes = [8, 128], strides = [1, 1]} : vector<8x512xf32> to vector<8x128xf32>
    %223 = math.tanh %222 : vector<8x128xf32>
    %224 = vector.extract_strided_slice %209 {offsets = [0, 384], sizes = [8, 128], strides = [1, 1]} : vector<8x512xf32> to vector<8x128xf32>
    %225 = arith.negf %224 : vector<8x128xf32>
    %226 = math.exp %225 : vector<8x128xf32>
    %cst_61 = arith.constant 1.000000e+00 : f32
    %227 = vector.broadcast %cst_61 : f32 to vector<8x128xf32>
    %228 = arith.addf %227, %226 : vector<8x128xf32>
    %229 = arith.divf %227, %228 : vector<8x128xf32>
    %230 = arith.mulf %221, %200 : vector<8x128xf32>
    %231 = arith.mulf %215, %223 : vector<8x128xf32>
    %232 = arith.addf %230, %231 : vector<8x128xf32>
    %233 = math.tanh %232 : vector<8x128xf32>
    %234 = arith.mulf %229, %233 : vector<8x128xf32>
    %c7_i32 = arith.constant 7 : i32
    %c8_i32_62 = arith.constant 8 : i32
    %235 = arith.muli %c7_i32, %c8_i32_62 : i32
    %236 = tpu.assume_multiple %235, 8 : i32
    %237 = arith.index_cast %236 : i32 to index
    %c0_63 = arith.constant 0 : index
    %238 = vector.load %arg6[%237, %c0_63] : memref<64x512xf32, #tpu.memory_space<vmem>>, vector<8x512xf32>
    %c0_64 = arith.constant 0 : index
    %c0_65 = arith.constant 0 : index
    %239 = vector.load %arg2[%c0_64, %c0_65] : memref<128x512xf32, #tpu.memory_space<vmem>>, vector<128x512xf32>
    %cst_66 = arith.constant dense<0.000000e+00> : vector<8x512xf32>
    %240 = tpu.matmul %234, %239, %cst_66 {dimension_numbers = #tpu.dot_dimension_numbers<[1], [0], [0], [1], [0, 0, 1, 1], [], []>} : vector<8x128xf32>, vector<128x512xf32>, vector<8x512xf32> -> vector<8x512xf32>
    %241 = arith.addf %238, %240 : vector<8x512xf32>
    %242 = vector.extract_strided_slice %241 {offsets = [0, 0], sizes = [8, 128], strides = [1, 1]} : vector<8x512xf32> to vector<8x128xf32>
    %243 = arith.negf %242 : vector<8x128xf32>
    %244 = math.exp %243 : vector<8x128xf32>
    %cst_67 = arith.constant 1.000000e+00 : f32
    %245 = vector.broadcast %cst_67 : f32 to vector<8x128xf32>
    %246 = arith.addf %245, %244 : vector<8x128xf32>
    %247 = arith.divf %245, %246 : vector<8x128xf32>
    %248 = vector.extract_strided_slice %241 {offsets = [0, 128], sizes = [8, 128], strides = [1, 1]} : vector<8x512xf32> to vector<8x128xf32>
    %249 = arith.negf %248 : vector<8x128xf32>
    %250 = math.exp %249 : vector<8x128xf32>
    %cst_68 = arith.constant 1.000000e+00 : f32
    %251 = vector.broadcast %cst_68 : f32 to vector<8x128xf32>
    %252 = arith.addf %251, %250 : vector<8x128xf32>
    %253 = arith.divf %251, %252 : vector<8x128xf32>
    %254 = vector.extract_strided_slice %241 {offsets = [0, 256], sizes = [8, 128], strides = [1, 1]} : vector<8x512xf32> to vector<8x128xf32>
    %255 = math.tanh %254 : vector<8x128xf32>
    %256 = vector.extract_strided_slice %241 {offsets = [0, 384], sizes = [8, 128], strides = [1, 1]} : vector<8x512xf32> to vector<8x128xf32>
    %257 = arith.negf %256 : vector<8x128xf32>
    %258 = math.exp %257 : vector<8x128xf32>
    %cst_69 = arith.constant 1.000000e+00 : f32
    %259 = vector.broadcast %cst_69 : f32 to vector<8x128xf32>
    %260 = arith.addf %259, %258 : vector<8x128xf32>
    %261 = arith.divf %259, %260 : vector<8x128xf32>
    %262 = arith.mulf %253, %232 : vector<8x128xf32>
    %263 = arith.mulf %247, %255 : vector<8x128xf32>
    %264 = arith.addf %262, %263 : vector<8x128xf32>
    %265 = math.tanh %264 : vector<8x128xf32>
    %266 = arith.mulf %261, %265 : vector<8x128xf32>
    %c8_i32_70 = arith.constant 8 : i32
    %c0_71 = arith.constant 0 : index
    %c0_72 = arith.constant 0 : index
    %267 = vector.load %arg3[%c0_71, %c0_72] : memref<128x128xf32, #tpu.memory_space<vmem>>, vector<128x128xf32>
    %cst_73 = arith.constant dense<0.000000e+00> : vector<8x128xf32>
    %268 = tpu.matmul %266, %267, %cst_73 {dimension_numbers = #tpu.dot_dimension_numbers<[1], [0], [0], [1], [0, 0, 1, 1], [], []>} : vector<8x128xf32>, vector<128x128xf32>, vector<8x128xf32> -> vector<8x128xf32>
    %c0_74 = arith.constant 0 : index
    %c0_75 = arith.constant 0 : index
    %269 = vector.load %arg4[%c0_74, %c0_75] : memref<1x128xf32, #tpu.memory_space<vmem>>, vector<1x128xf32>
    %270 = vector.broadcast %269 : vector<1x128xf32> to vector<8x128xf32>
    %271 = arith.addf %268, %270 : vector<8x128xf32>
    %c0_76 = arith.constant 0 : index
    %c0_77 = arith.constant 0 : index
    %272 = vector.load %arg5[%c0_76, %c0_77] : memref<8x128xf32, #tpu.memory_space<vmem>>, vector<8x128xf32>
    tpu.vector_store %arg5[%c0_76, %c0_77], %271 {strides = array<i32>} : memref<8x128xf32, #tpu.memory_space<vmem>>, vector<8x128xf32>,
    return
  }
}

</mosaic_0001>

<llo_original>
// kernel: simple_llm_forward.1
$region0: #{simple_llm_forward.1}
  #allocation0 [shape = 'u32[]', space=smem, size = 0x4, offset = 0x4, fixed_abs, tag = 'smem constant byte address 0x4 - core index']
  #allocation1 [shape = 'u32[72,128]{1,0:T(1,128)}', space=vmem, size = 0x9000, scoped, tag = 'internal scratch']
  #allocation2 [shape = 'f32[64,512]{1,0:T(8,128)}', space=vmem, size = 0x20000, scoped, tag = 'scratch operand']
  %s0 = inlined_call_operand.vmem [shape: s32[64,1], index: 0, kind: input, shape index: {}]
  %s1 = inlined_call_operand.hbm [shape: f32[128,512], index: 1, kind: input, shape index: {}]
  %s2 = inlined_call_operand.hbm [shape: f32[128,512], index: 2, kind: input, shape index: {}]
  %s3 = inlined_call_operand.hbm [shape: f32[128,128], index: 3, kind: input, shape index: {}]
  %s4 = inlined_call_operand.vmem [shape: f32[1,128], index: 4, kind: input, shape index: {}]
  %s5 = inlined_call_operand.vmem [shape: f32[8,128], index: 5, kind: output, shape index: {}]
  %s6 = sld [smem:[#allocation0]]
  $region42: #{simple_llm_forward.1} parent=0
    _
  %s8 = ssub.s32 1, %s6
  %s9 = scalar_select 0, %s8, %s6
  $region1: #{simple_llm_forward.1} parent=0
    #allocation3 [shape = 'u8[262144]{0}', space=vmem, size = 0x40000, scoped, tag = 'input window, operand 1, single buffered']
    #allocation4 [shape = 's32[1]{0}', space=sflag, size = 0x4, scoped, tag = 'scoped memory for simple_llm_forward.1']
    #allocation5 [shape = 'u8[262144]{0}', space=vmem, size = 0x40000, scoped, tag = 'input window, operand 2, single buffered']
    #allocation6 [shape = 's32[1]{0}', space=sflag, size = 0x4, scoped, tag = 'scoped memory for simple_llm_forward.1']
    #allocation7 [shape = 'u8[65536]{0}', space=vmem, size = 0x10000, scoped, tag = 'input window, operand 3, single buffered']
    %10 = vsyncpa [#allocation4], 0
    %11 = vsyncpa [#allocation6], 0
    // Predicated region
    $region2: #{simple_llm_forward.1} parent=1 // pred_check
      _
    $region3: #{simple_llm_forward.1} parent=1 // pred_check_branch
      %13 = sbr.rel (0) target = $region5
    $region4: #{simple_llm_forward.1} parent=1 // pred_region
      _
    $region5: #{simple_llm_forward.1} parent=1 // pred_fallthru
      _
    // Predicated region
    $region6: #{simple_llm_forward.1} parent=1 // pred_check
      _
    $region7: #{simple_llm_forward.1} parent=1 // pred_check_branch
      %15 = sbr.rel (0) target = $region9
    $region8: #{simple_llm_forward.1} parent=1 // pred_region
      %17 = vsyncadd [#allocation4], 0
      %s18 = sshll.u32 %s1, 4
      %s19 = int_to_ptr.hbm [resolvable:$true] %s18
      %s20 = sshll.u32 [#allocation3], 4
      %s21 = int_to_ptr.vmem [resolvable:$true] %s20
      %26 = dma.hbm_to_vmem [thread:$0]  %s19, 8192, %s21, [#allocation4], 512, 512, 32
    $region9: #{simple_llm_forward.1} parent=1 // pred_fallthru
      _
    // Predicated region
    $region10: #{simple_llm_forward.1} parent=1 // pred_check
      _
    $region11: #{simple_llm_forward.1} parent=1 // pred_check_branch
      %28 = sbr.rel (0) target = $region13
    $region12: #{simple_llm_forward.1} parent=1 // pred_region
      %30 = vsyncadd [#allocation6], 0
      %s31 = sshll.u32 %s2, 4
      %s32 = int_to_ptr.hbm [resolvable:$true] %s31
      %s33 = sshll.u32 [#allocation5], 4
      %s34 = int_to_ptr.vmem [resolvable:$true] %s33
      %39 = dma.hbm_to_vmem [thread:$0]  %s32, 8192, %s34, [#allocation6], 512, 512, 32
    $region13: #{simple_llm_forward.1} parent=1 // pred_fallthru
      _
    // Predicated region
    $region14: #{simple_llm_forward.1} parent=1 // pred_check
      _
    $region15: #{simple_llm_forward.1} parent=1 // pred_check_branch
      %41 = sbr.rel (0) target = $region17
    $region16: #{simple_llm_forward.1} parent=1 // pred_region
      %43 = vsyncadd [#allocation6], 0
      %s44 = sshll.u32 %s3, 4
      %s45 = int_to_ptr.hbm [resolvable:$true] %s44
      %s46 = sshll.u32 [#allocation7], 4
      %s47 = int_to_ptr.vmem [resolvable:$true] %s46
      %52 = dma.hbm_to_vmem [thread:$0]  %s45, 2048, %s47, [#allocation6], 128, 128, 8
    $region17: #{simple_llm_forward.1} parent=1 // pred_fallthru
      _
    // Predicated region
    $region18: #{simple_llm_forward.1} parent=1 // pred_check
      _
    $region19: #{simple_llm_forward.1} parent=1 // pred_check_branch
      %54 = sbr.rel (0) target = $region21
    $region20: #{simple_llm_forward.1} parent=1 // pred_region
      _
    $region21: #{simple_llm_forward.1} parent=1 // pred_fallthru
      _
    // Predicated region
    $region22: #{simple_llm_forward.1} parent=1 // pred_check
      _
    $region23: #{simple_llm_forward.1} parent=1 // pred_check_branch
      %56 = sbr.rel (0) target = $region25
    $region24: #{simple_llm_forward.1} parent=1 // pred_region
      %58 = dma.done [#allocation4], 8192
    $region25: #{simple_llm_forward.1} parent=1 // pred_fallthru
      _
    // Predicated region
    $region26: #{simple_llm_forward.1} parent=1 // pred_check
      _
    $region27: #{simple_llm_forward.1} parent=1 // pred_check_branch
      %60 = sbr.rel (0) target = $region29
    $region28: #{simple_llm_forward.1} parent=1 // pred_region
      %62 = dma.done [#allocation6], 8192
    $region29: #{simple_llm_forward.1} parent=1 // pred_fallthru
      _
    // Predicated region
    $region30: #{simple_llm_forward.1} parent=1 // pred_check
      _
    $region31: #{simple_llm_forward.1} parent=1 // pred_check_branch
      %64 = sbr.rel (0) target = $region33
    $region32: #{simple_llm_forward.1} parent=1 // pred_region
      %66 = dma.done [#allocation6], 2048
    $region33: #{simple_llm_forward.1} parent=1 // pred_fallthru
      _
    %v67 = vld [vmem:[%s0] sm:$0xff]
    %v68 = vld [vmem:[%s0 + $0x8] sm:$0xff]
    %v69 = vld [vmem:[%s0 + $0x10] sm:$0xff]
    %v70 = vld [vmem:[%s0 + $0x18] sm:$0xff]
    %v71 = vld [vmem:[%s0 + $0x20] sm:$0xff]
    %v72 = vld [vmem:[%s0 + $0x28] sm:$0xff]
    %v73 = vld [vmem:[%s0 + $0x30] sm:$0xff]
    %v74 = vld [vmem:[%s0 + $0x38] sm:$0xff]
    %v75 = vlaneseq
    %v76 = vand.u32 %v75, 127
    %77 = vset.pattern.permute.xlu0 0
    %78 = vperm.xlu0 %77, %v67
    %v79 = vpop.permute.xlu0 %78
    %80 = vset.pattern.permute.xlu0 0
    %81 = vperm.xlu0 %80, %v68
    %v82 = vpop.permute.xlu0 %81
    %83 = vset.pattern.permute.xlu0 0
    %84 = vperm.xlu0 %83, %v69
    %v85 = vpop.permute.xlu0 %84
    %86 = vset.pattern.permute.xlu0 0
    %87 = vperm.xlu0 %86, %v70
    %v88 = vpop.permute.xlu0 %87
    %89 = vset.pattern.permute.xlu0 0
    %90 = vperm.xlu0 %89, %v71
    %v91 = vpop.permute.xlu0 %90
    %92 = vset.pattern.permute.xlu0 0
    %93 = vperm.xlu0 %92, %v72
    %v94 = vpop.permute.xlu0 %93
    %95 = vset.pattern.permute.xlu0 0
    %96 = vperm.xlu0 %95, %v73
    %v97 = vpop.permute.xlu0 %96
    %98 = vset.pattern.permute.xlu0 0
    %99 = vperm.xlu0 %98, %v74
    %v100 = vpop.permute.xlu0 %99
    %vm101 = vcmp.eq.s32.totalorder %v79, %v76
    %vm102 = vcmp.eq.s32.totalorder %v82, %v76
    %vm103 = vcmp.eq.s32.totalorder %v85, %v76
    %vm104 = vcmp.eq.s32.totalorder %v88, %v76
    %vm105 = vcmp.eq.s32.totalorder %v91, %v76
    %vm106 = vcmp.eq.s32.totalorder %v94, %v76
    %vm107 = vcmp.eq.s32.totalorder %v97, %v76
    %vm108 = vcmp.eq.s32.totalorder %v100, %v76
    %v109 = vsel %vm101, 1, 0
    %v110 = vsel %vm102, 1, 0
    %v111 = vsel %vm103, 1, 0
    %v112 = vsel %vm104, 1, 0
    %v113 = vsel %vm105, 1, 0
    %v114 = vsel %vm106, 1, 0
    %v115 = vsel %vm107, 1, 0
    %v116 = vsel %vm108, 1, 0
    %v117 = vcvt.s32.f32 %v109
    %v118 = vcvt.s32.f32 %v110
    %v119 = vcvt.s32.f32 %v111
    %v120 = vcvt.s32.f32 %v112
    %v121 = vcvt.s32.f32 %v113
    %v122 = vcvt.s32.f32 %v114
    %v123 = vcvt.s32.f32 %v115
    %v124 = vcvt.s32.f32 %v116
    %v125 = vld [vmem:[#allocation3] sm:$0xff]
    %v126 = vld [vmem:[#allocation3 + $0x8] sm:$0xff]
    %v127 = vld [vmem:[#allocation3 + $0x10] sm:$0xff]
    %v128 = vld [vmem:[#allocation3 + $0x18] sm:$0xff]
    %v129 = vld [vmem:[#allocation3 + $0x20] sm:$0xff]
    %v130 = vld [vmem:[#allocation3 + $0x28] sm:$0xff]
    %v131 = vld [vmem:[#allocation3 + $0x30] sm:$0xff]
    %v132 = vld [vmem:[#allocation3 + $0x38] sm:$0xff]
    %v133 = vld [vmem:[#allocation3 + $0x40] sm:$0xff]
    %v134 = vld [vmem:[#allocation3 + $0x48] sm:$0xff]
    %v135 = vld [vmem:[#allocation3 + $0x50] sm:$0xff]
    %v136 = vld [vmem:[#allocation3 + $0x58] sm:$0xff]
    %v137 = vld [vmem:[#allocation3 + $0x60] sm:$0xff]
    %v138 = vld [vmem:[#allocation3 + $0x68] sm:$0xff]
    %v139 = vld [vmem:[#allocation3 + $0x70] sm:$0xff]
    %v140 = vld [vmem:[#allocation3 + $0x78] sm:$0xff]
    %v141 = vld [vmem:[#allocation3 + $0x80] sm:$0xff]
    %v142 = vld [vmem:[#allocation3 + $0x88] sm:$0xff]
    %v143 = vld [vmem:[#allocation3 + $0x90] sm:$0xff]
    %v144 = vld [vmem:[#allocation3 + $0x98] sm:$0xff]
    %v145 = vld [vmem:[#allocation3 + $0xa0] sm:$0xff]
    %v146 = vld [vmem:[#allocation3 + $0xa8] sm:$0xff]
    %v147 = vld [vmem:[#allocation3 + $0xb0] sm:$0xff]
    %v148 = vld [vmem:[#allocation3 + $0xb8] sm:$0xff]
    %v149 = vld [vmem:[#allocation3 + $0xc0] sm:$0xff]
    %v150 = vld [vmem:[#allocation3 + $0xc8] sm:$0xff]
    %v151 = vld [vmem:[#allocation3 + $0xd0] sm:$0xff]
    %v152 = vld [vmem:[#allocation3 + $0xd8] sm:$0xff]
    %v153 = vld [vmem:[#allocation3 + $0xe0] sm:$0xff]
    %v154 = vld [vmem:[#allocation3 + $0xe8] sm:$0xff]
    %v155 = vld [vmem:[#allocation3 + $0xf0] sm:$0xff]
    %v156 = vld [vmem:[#allocation3 + $0xf8] sm:$0xff]
    %v157 = vld [vmem:[#allocation3 + $0x100] sm:$0xff]
    %v158 = vld [vmem:[#allocation3 + $0x108] sm:$0xff]
    %v159 = vld [vmem:[#allocation3 + $0x110] sm:$0xff]
    %v160 = vld [vmem:[#allocation3 + $0x118] sm:$0xff]
    %v161 = vld [vmem:[#allocation3 + $0x120] sm:$0xff]
    %v162 = vld [vmem:[#allocation3 + $0x128] sm:$0xff]
    %v163 = vld [vmem:[#allocation3 + $0x130] sm:$0xff]
    %v164 = vld [vmem:[#allocation3 + $0x138] sm:$0xff]
    %v165 = vld [vmem:[#allocation3 + $0x140] sm:$0xff]
    %v166 = vld [vmem:[#allocation3 + $0x148] sm:$0xff]
    %v167 = vld [vmem:[#allocation3 + $0x150] sm:$0xff]
    %v168 = vld [vmem:[#allocation3 + $0x158] sm:$0xff]
    %v169 = vld [vmem:[#allocation3 + $0x160] sm:$0xff]
    %v170 = vld [vmem:[#allocation3 + $0x168] sm:$0xff]
    %v171 = vld [vmem:[#allocation3 + $0x170] sm:$0xff]
    %v172 = vld [vmem:[#allocation3 + $0x178] sm:$0xff]
    %v173 = vld [vmem:[#allocation3 + $0x180] sm:$0xff]
    %v174 = vld [vmem:[#allocation3 + $0x188] sm:$0xff]
    %v175 = vld [vmem:[#allocation3 + $0x190] sm:$0xff]
    %v176 = vld [vmem:[#allocation3 + $0x198] sm:$0xff]
    %v177 = vld [vmem:[#allocation3 + $0x1a0] sm:$0xff]
    %v178 = vld [vmem:[#allocation3 + $0x1a8] sm:$0xff]
    %v179 = vld [vmem:[#allocation3 + $0x1b0] sm:$0xff]
    %v180 = vld [vmem:[#allocation3 + $0x1b8] sm:$0xff]
    %v181 = vld [vmem:[#allocation3 + $0x1c0] sm:$0xff]
    %v182 = vld [vmem:[#allocation3 + $0x1c8] sm:$0xff]
    %v183 = vld [vmem:[#allocation3 + $0x1d0] sm:$0xff]
    %v184 = vld [vmem:[#allocation3 + $0x1d8] sm:$0xff]
    %v185 = vld [vmem:[#allocation3 + $0x1e0] sm:$0xff]
    %v186 = vld [vmem:[#allocation3 + $0x1e8] sm:$0xff]
    %v187 = vld [vmem:[#allocation3 + $0x1f0] sm:$0xff]
    %v188 = vld [vmem:[#allocation3 + $0x1f8] sm:$0xff]
    %189 = vmatpush.msra.mxu0 %v185
    %190 = vmatpush.msra.mxu0 %v181
    %191 = vmatpush.msra.mxu0 %v177
    %192 = vmatpush.msra.mxu0 %v173
    %193 = vmatpush.msra.mxu0 %v169
    %194 = vmatpush.msra.mxu0 %v165
    %195 = vmatpush.msra.mxu0 %v161
    %196 = vmatpush.msra.mxu0 %v157
    %197 = vmatpush.msra.mxu0 %v153
    %198 = vmatpush.msra.mxu0 %v149
    %199 = vmatpush.msra.mxu0 %v145
    %200 = vmatpush.msra.mxu0 %v141
    %201 = vmatpush.msra.mxu0 %v137
    %202 = vmatpush.msra.mxu0 %v133
    %203 = vmatpush.msra.mxu0 %v129
    %204 = vmatpush.msra.mxu0 %v125
    %205 = vmatmul.f32.gmra.mxu0 %v117
    %v206 = vpop.f32.mrf.mxu0
    %v207 = vadd.f32 0.0, %v206
    %208 = vmatmul.f32.gmra.mxu0 %v118
    %v209 = vpop.f32.mrf.mxu0
    %v210 = vadd.f32 0.0, %v209
    %211 = vmatmul.f32.gmra.mxu0 %v119
    %v212 = vpop.f32.mrf.mxu0
    %v213 = vadd.f32 0.0, %v212
    %214 = vmatmul.f32.gmra.mxu0 %v120
    %v215 = vpop.f32.mrf.mxu0
    %v216 = vadd.f32 0.0, %v215
    %217 = vmatmul.f32.gmra.mxu0 %v121
    %v218 = vpop.f32.mrf.mxu0
    %v219 = vadd.f32 0.0, %v218
    %220 = vmatmul.f32.gmra.mxu0 %v122
    %v221 = vpop.f32.mrf.mxu0
    %v222 = vadd.f32 0.0, %v221
    %223 = vmatmul.f32.gmra.mxu0 %v123
    %v224 = vpop.f32.mrf.mxu0
    %v225 = vadd.f32 0.0, %v224
    %226 = vmatmul.f32.gmra.mxu0 %v124
    %v227 = vpop.f32.mrf.mxu0
    %v228 = vadd.f32 0.0, %v227
    %229 = vdwg.mxu0
    %230 = vmatpush.msra.mxu0 %v186
    %231 = vmatpush.msra.mxu0 %v182
    %232 = vmatpush.msra.mxu0 %v178
    %233 = vmatpush.msra.mxu0 %v174
    %234 = vmatpush.msra.mxu0 %v170
    %235 = vmatpush.msra.mxu0 %v166
    %236 = vmatpush.msra.mxu0 %v162
    %237 = vmatpush.msra.mxu0 %v158
    %238 = vmatpush.msra.mxu0 %v154
    %239 = vmatpush.msra.mxu0 %v150
    %240 = vmatpush.msra.mxu0 %v146
    %241 = vmatpush.msra.mxu0 %v142
    %242 = vmatpush.msra.mxu0 %v138
    %243 = vmatpush.msra.mxu0 %v134
    %244 = vmatpush.msra.mxu0 %v130
    %245 = vmatpush.msra.mxu0 %v126
    %246 = vmatmul.f32.gmra.mxu0 %v117
    %v247 = vpop.f32.mrf.mxu0
    %v248 = vadd.f32 0.0, %v247
    %249 = vmatmul.f32.gmra.mxu0 %v118
    %v250 = vpop.f32.mrf.mxu0
    %v251 = vadd.f32 0.0, %v250
    %252 = vmatmul.f32.gmra.mxu0 %v119
    %v253 = vpop.f32.mrf.mxu0
    %v254 = vadd.f32 0.0, %v253
    %255 = vmatmul.f32.gmra.mxu0 %v120
    %v256 = vpop.f32.mrf.mxu0
    %v257 = vadd.f32 0.0, %v256
    %258 = vmatmul.f32.gmra.mxu0 %v121
    %v259 = vpop.f32.mrf.mxu0
    %v260 = vadd.f32 0.0, %v259
    %261 = vmatmul.f32.gmra.mxu0 %v122
    %v262 = vpop.f32.mrf.mxu0
    %v263 = vadd.f32 0.0, %v262
    %264 = vmatmul.f32.gmra.mxu0 %v123
    %v265 = vpop.f32.mrf.mxu0
    %v266 = vadd.f32 0.0, %v265
    %267 = vmatmul.f32.gmra.mxu0 %v124
    %v268 = vpop.f32.mrf.mxu0
    %v269 = vadd.f32 0.0, %v268
    %270 = vdwg.mxu0
    %271 = vmatpush.msra.mxu0 %v187
    %272 = vmatpush.msra.mxu0 %v183
    %273 = vmatpush.msra.mxu0 %v179
    %274 = vmatpush.msra.mxu0 %v175
    %275 = vmatpush.msra.mxu0 %v171
    %276 = vmatpush.msra.mxu0 %v167
    %277 = vmatpush.msra.mxu0 %v163
    %278 = vmatpush.msra.mxu0 %v159
    %279 = vmatpush.msra.mxu0 %v155
    %280 = vmatpush.msra.mxu0 %v151
    %281 = vmatpush.msra.mxu0 %v147
    %282 = vmatpush.msra.mxu0 %v143
    %283 = vmatpush.msra.mxu0 %v139
    %284 = vmatpush.msra.mxu0 %v135
    %285 = vmatpush.msra.mxu0 %v131
    %286 = vmatpush.msra.mxu0 %v127
    %287 = vmatmul.f32.gmra.mxu0 %v117
    %v288 = vpop.f32.mrf.mxu0
    %v289 = vadd.f32 0.0, %v288
    %290 = vmatmul.f32.gmra.mxu0 %v118
    %v291 = vpop.f32.mrf.mxu0
    %v292 = vadd.f32 0.0, %v291
    %293 = vmatmul.f32.gmra.mxu0 %v119
    %v294 = vpop.f32.mrf.mxu0
    %v295 = vadd.f32 0.0, %v294
    %296 = vmatmul.f32.gmra.mxu0 %v120
    %v297 = vpop.f32.mrf.mxu0
    %v298 = vadd.f32 0.0, %v297
    %299 = vmatmul.f32.gmra.mxu0 %v121
    %v300 = vpop.f32.mrf.mxu0
    %v301 = vadd.f32 0.0, %v300
    %302 = vmatmul.f32.gmra.mxu0 %v122
    %v303 = vpop.f32.mrf.mxu0
    %v304 = vadd.f32 0.0, %v303
    %305 = vmatmul.f32.gmra.mxu0 %v123
    %v306 = vpop.f32.mrf.mxu0
    %v307 = vadd.f32 0.0, %v306
    %308 = vmatmul.f32.gmra.mxu0 %v124
    %v309 = vpop.f32.mrf.mxu0
    %v310 = vadd.f32 0.0, %v309
    %311 = vdwg.mxu0
    %312 = vmatpush.msra.mxu0 %v188
    %313 = vmatpush.msra.mxu0 %v184
    %314 = vmatpush.msra.mxu0 %v180
    %315 = vmatpush.msra.mxu0 %v176
    %316 = vmatpush.msra.mxu0 %v172
    %317 = vmatpush.msra.mxu0 %v168
    %318 = vmatpush.msra.mxu0 %v164
    %319 = vmatpush.msra.mxu0 %v160
    %320 = vmatpush.msra.mxu0 %v156
    %321 = vmatpush.msra.mxu0 %v152
    %322 = vmatpush.msra.mxu0 %v148
    %323 = vmatpush.msra.mxu0 %v144
    %324 = vmatpush.msra.mxu0 %v140
    %325 = vmatpush.msra.mxu0 %v136
    %326 = vmatpush.msra.mxu0 %v132
    %327 = vmatpush.msra.mxu0 %v128
    %328 = vmatmul.f32.gmra.mxu0 %v117
    %v329 = vpop.f32.mrf.mxu0
    %v330 = vadd.f32 0.0, %v329
    %331 = vmatmul.f32.gmra.mxu0 %v118
    %v332 = vpop.f32.mrf.mxu0
    %v333 = vadd.f32 0.0, %v332
    %334 = vmatmul.f32.gmra.mxu0 %v119
    %v335 = vpop.f32.mrf.mxu0
    %v336 = vadd.f32 0.0, %v335
    %337 = vmatmul.f32.gmra.mxu0 %v120
    %v338 = vpop.f32.mrf.mxu0
    %v339 = vadd.f32 0.0, %v338
    %340 = vmatmul.f32.gmra.mxu0 %v121
    %v341 = vpop.f32.mrf.mxu0
    %v342 = vadd.f32 0.0, %v341
    %343 = vmatmul.f32.gmra.mxu0 %v122
    %v344 = vpop.f32.mrf.mxu0
    %v345 = vadd.f32 0.0, %v344
    %346 = vmatmul.f32.gmra.mxu0 %v123
    %v347 = vpop.f32.mrf.mxu0
    %v348 = vadd.f32 0.0, %v347
    %349 = vmatmul.f32.gmra.mxu0 %v124
    %v350 = vpop.f32.mrf.mxu0
    %v351 = vadd.f32 0.0, %v350
    %352 = vdwg.mxu0
    %353 = vst [vmem:[#allocation2] sm:$0xff] %v207
    %354 = vst [vmem:[#allocation2 + $0x8] sm:$0xff] %v248
    %355 = vst [vmem:[#allocation2 + $0x10] sm:$0xff] %v289
    %356 = vst [vmem:[#allocation2 + $0x18] sm:$0xff] %v330
    %357 = vst [vmem:[#allocation2 + $0x20] sm:$0xff] %v210
    %358 = vst [vmem:[#allocation2 + $0x28] sm:$0xff] %v251
    %359 = vst [vmem:[#allocation2 + $0x30] sm:$0xff] %v292
    %360 = vst [vmem:[#allocation2 + $0x38] sm:$0xff] %v333
    %361 = vst [vmem:[#allocation2 + $0x40] sm:$0xff] %v213
    %362 = vst [vmem:[#allocation2 + $0x48] sm:$0xff] %v254
    %363 = vst [vmem:[#allocation2 + $0x50] sm:$0xff] %v295
    %364 = vst [vmem:[#allocation2 + $0x58] sm:$0xff] %v336
    %365 = vst [vmem:[#allocation2 + $0x60] sm:$0xff] %v216
    %366 = vst [vmem:[#allocation2 + $0x68] sm:$0xff] %v257
    %367 = vst [vmem:[#allocation2 + $0x70] sm:$0xff] %v298
    %368 = vst [vmem:[#allocation2 + $0x78] sm:$0xff] %v339
    %369 = vst [vmem:[#allocation2 + $0x80] sm:$0xff] %v219
    %370 = vst [vmem:[#allocation2 + $0x88] sm:$0xff] %v260
    %371 = vst [vmem:[#allocation2 + $0x90] sm:$0xff] %v301
    %372 = vst [vmem:[#allocation2 + $0x98] sm:$0xff] %v342
    %373 = vst [vmem:[#allocation2 + $0xa0] sm:$0xff] %v222
    %374 = vst [vmem:[#allocation2 + $0xa8] sm:$0xff] %v263
    %375 = vst [vmem:[#allocation2 + $0xb0] sm:$0xff] %v304
    %376 = vst [vmem:[#allocation2 + $0xb8] sm:$0xff] %v345
    %377 = vst [vmem:[#allocation2 + $0xc0] sm:$0xff] %v225
    %378 = vst [vmem:[#allocation2 + $0xc8] sm:$0xff] %v266
    %379 = vst [vmem:[#allocation2 + $0xd0] sm:$0xff] %v307
    %380 = vst [vmem:[#allocation2 + $0xd8] sm:$0xff] %v348
    %381 = vst [vmem:[#allocation2 + $0xe0] sm:$0xff] %v228
    %382 = vst [vmem:[#allocation2 + $0xe8] sm:$0xff] %v269
    %383 = vst [vmem:[#allocation2 + $0xf0] sm:$0xff] %v310
    %384 = vst [vmem:[#allocation2 + $0xf8] sm:$0xff] %v351
    %s385 = smul.u32 0, 4
    %s386 = smul.addr %s385, 8
    %s387 = scalar_lea.vmem [#allocation2], %s386
    %v388 = vld [vmem:[%s387] sm:$0xff]
    %v389 = vld [vmem:[%s387 + $0x8] sm:$0xff]
    %v390 = vld [vmem:[%s387 + $0x10] sm:$0xff]
    %v391 = vld [vmem:[%s387 + $0x18] sm:$0xff]
    %v392 = vld [vmem:[#allocation5] sm:$0xff]
    %v393 = vld [vmem:[#allocation5 + $0x8] sm:$0xff]
    %v394 = vld [vmem:[#allocation5 + $0x10] sm:$0xff]
    %v395 = vld [vmem:[#allocation5 + $0x18] sm:$0xff]
    %v396 = vld [vmem:[#allocation5 + $0x20] sm:$0xff]
    %v397 = vld [vmem:[#allocation5 + $0x28] sm:$0xff]
    %v398 = vld [vmem:[#allocation5 + $0x30] sm:$0xff]
    %v399 = vld [vmem:[#allocation5 + $0x38] sm:$0xff]
    %v400 = vld [vmem:[#allocation5 + $0x40] sm:$0xff]
    %v401 = vld [vmem:[#allocation5 + $0x48] sm:$0xff]
    %v402 = vld [vmem:[#allocation5 + $0x50] sm:$0xff]
    %v403 = vld [vmem:[#allocation5 + $0x58] sm:$0xff]
    %v404 = vld [vmem:[#allocation5 + $0x60] sm:$0xff]
    %v405 = vld [vmem:[#allocation5 + $0x68] sm:$0xff]
    %v406 = vld [vmem:[#allocation5 + $0x70] sm:$0xff]
    %v407 = vld [vmem:[#allocation5 + $0x78] sm:$0xff]
    %v408 = vld [vmem:[#allocation5 + $0x80] sm:$0xff]
    %v409 = vld [vmem:[#allocation5 + $0x88] sm:$0xff]
    %v410 = vld [vmem:[#allocation5 + $0x90] sm:$0xff]
    %v411 = vld [vmem:[#allocation5 + $0x98] sm:$0xff]
    %v412 = vld [vmem:[#allocation5 + $0xa0] sm:$0xff]
    %v413 = vld [vmem:[#allocation5 + $0xa8] sm:$0xff]
    %v414 = vld [vmem:[#allocation5 + $0xb0] sm:$0xff]
    %v415 = vld [vmem:[#allocation5 + $0xb8] sm:$0xff]
    %v416 = vld [vmem:[#allocation5 + $0xc0] sm:$0xff]
    %v417 = vld [vmem:[#allocation5 + $0xc8] sm:$0xff]
    %v418 = vld [vmem:[#allocation5 + $0xd0] sm:$0xff]
    %v419 = vld [vmem:[#allocation5 + $0xd8] sm:$0xff]
    %v420 = vld [vmem:[#allocation5 + $0xe0] sm:$0xff]
    %v421 = vld [vmem:[#allocation5 + $0xe8] sm:$0xff]
    %v422 = vld [vmem:[#allocation5 + $0xf0] sm:$0xff]
    %v423 = vld [vmem:[#allocation5 + $0xf8] sm:$0xff]
    %v424 = vld [vmem:[#allocation5 + $0x100] sm:$0xff]
    %v425 = vld [vmem:[#allocation5 + $0x108] sm:$0xff]
    %v426 = vld [vmem:[#allocation5 + $0x110] sm:$0xff]
    %v427 = vld [vmem:[#allocation5 + $0x118] sm:$0xff]
    %v428 = vld [vmem:[#allocation5 + $0x120] sm:$0xff]
    %v429 = vld [vmem:[#allocation5 + $0x128] sm:$0xff]
    %v430 = vld [vmem:[#allocation5 + $0x130] sm:$0xff]
    %v431 = vld [vmem:[#allocation5 + $0x138] sm:$0xff]
    %v432 = vld [vmem:[#allocation5 + $0x140] sm:$0xff]
    %v433 = vld [vmem:[#allocation5 + $0x148] sm:$0xff]
    %v434 = vld [vmem:[#allocation5 + $0x150] sm:$0xff]
    %v435 = vld [vmem:[#allocation5 + $0x158] sm:$0xff]
    %v436 = vld [vmem:[#allocation5 + $0x160] sm:$0xff]
    %v437 = vld [vmem:[#allocation5 + $0x168] sm:$0xff]
    %v438 = vld [vmem:[#allocation5 + $0x170] sm:$0xff]
    %v439 = vld [vmem:[#allocation5 + $0x178] sm:$0xff]
    %v440 = vld [vmem:[#allocation5 + $0x180] sm:$0xff]
    %v441 = vld [vmem:[#allocation5 + $0x188] sm:$0xff]
    %v442 = vld [vmem:[#allocation5 + $0x190] sm:$0xff]
    %v443 = vld [vmem:[#allocation5 + $0x198] sm:$0xff]
    %v444 = vld [vmem:[#allocation5 + $0x1a0] sm:$0xff]
    %v445 = vld [vmem:[#allocation5 + $0x1a8] sm:$0xff]
    %v446 = vld [vmem:[#allocation5 + $0x1b0] sm:$0xff]
    %v447 = vld [vmem:[#allocation5 + $0x1b8] sm:$0xff]
    %v448 = vld [vmem:[#allocation5 + $0x1c0] sm:$0xff]
    %v449 = vld [vmem:[#allocation5 + $0x1c8] sm:$0xff]
    %v450 = vld [vmem:[#allocation5 + $0x1d0] sm:$0xff]
    %v451 = vld [vmem:[#allocation5 + $0x1d8] sm:$0xff]
    %v452 = vld [vmem:[#allocation5 + $0x1e0] sm:$0xff]
    %v453 = vld [vmem:[#allocation5 + $0x1e8] sm:$0xff]
    %v454 = vld [vmem:[#allocation5 + $0x1f0] sm:$0xff]
    %v455 = vld [vmem:[#allocation5 + $0x1f8] sm:$0xff]
    %456 = vmatpush.msra.mxu0 %v452
    %457 = vmatpush.msra.mxu0 %v448
    %458 = vmatpush.msra.mxu0 %v444
    %459 = vmatpush.msra.mxu0 %v440
    %460 = vmatpush.msra.mxu0 %v436
    %461 = vmatpush.msra.mxu0 %v432
    %462 = vmatpush.msra.mxu0 %v428
    %463 = vmatpush.msra.mxu0 %v424
    %464 = vmatpush.msra.mxu0 %v420
    %465 = vmatpush.msra.mxu0 %v416
    %466 = vmatpush.msra.mxu0 %v412
    %467 = vmatpush.msra.mxu0 %v408
    %468 = vmatpush.msra.mxu0 %v404
    %469 = vmatpush.msra.mxu0 %v400
    %470 = vmatpush.msra.mxu0 %v396
    %471 = vmatpush.msra.mxu0 %v392
    %472 = vmatmul.f32.gmra.mxu0 0.0
    %v473 = vpop.f32.mrf.mxu0
    %v474 = vadd.f32 0.0, %v473
    %475 = vdwg.mxu0
    %476 = vmatpush.msra.mxu0 %v453
    %477 = vmatpush.msra.mxu0 %v449
    %478 = vmatpush.msra.mxu0 %v445
    %479 = vmatpush.msra.mxu0 %v441
    %480 = vmatpush.msra.mxu0 %v437
    %481 = vmatpush.msra.mxu0 %v433
    %482 = vmatpush.msra.mxu0 %v429
    %483 = vmatpush.msra.mxu0 %v425
    %484 = vmatpush.msra.mxu0 %v421
    %485 = vmatpush.msra.mxu0 %v417
    %486 = vmatpush.msra.mxu0 %v413
    %487 = vmatpush.msra.mxu0 %v409
    %488 = vmatpush.msra.mxu0 %v405
    %489 = vmatpush.msra.mxu0 %v401
    %490 = vmatpush.msra.mxu0 %v397
    %491 = vmatpush.msra.mxu0 %v393
    %492 = vmatmul.f32.gmra.mxu0 0.0
    %v493 = vpop.f32.mrf.mxu0
    %v494 = vadd.f32 0.0, %v493
    %495 = vdwg.mxu0
    %496 = vmatpush.msra.mxu0 %v454
    %497 = vmatpush.msra.mxu0 %v450
    %498 = vmatpush.msra.mxu0 %v446
    %499 = vmatpush.msra.mxu0 %v442
    %500 = vmatpush.msra.mxu0 %v438
    %501 = vmatpush.msra.mxu0 %v434
    %502 = vmatpush.msra.mxu0 %v430
    %503 = vmatpush.msra.mxu0 %v426
    %504 = vmatpush.msra.mxu0 %v422
    %505 = vmatpush.msra.mxu0 %v418
    %506 = vmatpush.msra.mxu0 %v414
    %507 = vmatpush.msra.mxu0 %v410
    %508 = vmatpush.msra.mxu0 %v406
    %509 = vmatpush.msra.mxu0 %v402
    %510 = vmatpush.msra.mxu0 %v398
    %511 = vmatpush.msra.mxu0 %v394
    %512 = vmatmul.f32.gmra.mxu0 0.0
    %v513 = vpop.f32.mrf.mxu0
    %v514 = vadd.f32 0.0, %v513
    %515 = vdwg.mxu0
    %516 = vmatpush.msra.mxu0 %v455
    %517 = vmatpush.msra.mxu0 %v451
    %518 = vmatpush.msra.mxu0 %v447
    %519 = vmatpush.msra.mxu0 %v443
    %520 = vmatpush.msra.mxu0 %v439
    %521 = vmatpush.msra.mxu0 %v435
    %522 = vmatpush.msra.mxu0 %v431
    %523 = vmatpush.msra.mxu0 %v427
    %524 = vmatpush.msra.mxu0 %v423
    %525 = vmatpush.msra.mxu0 %v419
    %526 = vmatpush.msra.mxu0 %v415
    %527 = vmatpush.msra.mxu0 %v411
    %528 = vmatpush.msra.mxu0 %v407
    %529 = vmatpush.msra.mxu0 %v403
    %530 = vmatpush.msra.mxu0 %v399
    %531 = vmatpush.msra.mxu0 %v395
    %532 = vmatmul.f32.gmra.mxu0 0.0
    %v533 = vpop.f32.mrf.mxu0
    %v534 = vadd.f32 0.0, %v533
    %535 = vdwg.mxu0
    %v536 = vadd.f32 %v388, %v474
    %v537 = vadd.f32 %v389, %v494
    %v538 = vadd.f32 %v390, %v514
    %v539 = vadd.f32 %v391, %v534
    %v540 = vxor.u32 %v536, 2147483648
    %v541 = vmul.f32 %v540, 1.442695
    %v542 = vpow.pop %v541
    %v543 = vadd.f32 %v542, 1.0
    %v544 = vrcp.pop %v543
    %v545 = vmul.f32 %v543, %v544
    %v546 = vsub.f32 1.0, %v545
    %v547 = vmul.f32 %v544, %v546
    %v548 = vadd.f32 %v544, %v547
    %vm549 = vweird.f32 %v543
    %vm550 = vweird.f32 %v544
    %vm551 = vmor %vm549, %vm550
    %v552 = vsel %vm551, %v544, %v548
    %v553 = vand.u32 2147483647, %v543
    %vm554 = vcmp.eq.f32.partialorder %v553, 8.507059e+37
    %v555 = vand.u32 %v543, 2147483648
    %v556 = vor.u32 1.1754944e-38, %v555
    %v557 = vsel %vm554, %v556, %v552
    %v558 = vmul.f32 1.0, %v557
    %v559 = vxor.u32 %v537, 2147483648
    %v560 = vmul.f32 %v559, 1.442695
    %v561 = vpow.pop %v560
    %v562 = vadd.f32 %v561, 1.0
    %v563 = vrcp.pop %v562
    %v564 = vmul.f32 %v562, %v563
    %v565 = vsub.f32 1.0, %v564
    %v566 = vmul.f32 %v563, %v565
    %v567 = vadd.f32 %v563, %v566
    %vm568 = vweird.f32 %v562
    %vm569 = vweird.f32 %v563
    %vm570 = vmor %vm568, %vm569
    %v571 = vsel %vm570, %v563, %v567
    %v572 = vand.u32 2147483647, %v562
    %vm573 = vcmp.eq.f32.partialorder %v572, 8.507059e+37
    %v574 = vand.u32 %v562, 2147483648
    %v575 = vor.u32 1.1754944e-38, %v574
    %v576 = vsel %vm573, %v575, %v571
    %v577 = vmul.f32 1.0, %v576
    %v578 = vtanh.pop %v538
    %v579 = vxor.u32 %v539, 2147483648
    %v580 = vmul.f32 %v579, 1.442695
    %v581 = vpow.pop %v580
    %v582 = vadd.f32 %v581, 1.0
    %v583 = vrcp.pop %v582
    %v584 = vmul.f32 %v582, %v583
    %v585 = vsub.f32 1.0, %v584
    %v586 = vmul.f32 %v583, %v585
    %v587 = vadd.f32 %v583, %v586
    %vm588 = vweird.f32 %v582
    %vm589 = vweird.f32 %v583
    %vm590 = vmor %vm588, %vm589
    %v591 = vsel %vm590, %v583, %v587
    %v592 = vand.u32 2147483647, %v582
    %vm593 = vcmp.eq.f32.partialorder %v592, 8.507059e+37
    %v594 = vand.u32 %v582, 2147483648
    %v595 = vor.u32 1.1754944e-38, %v594
    %v596 = vsel %vm593, %v595, %v591
    %v597 = vmul.f32 1.0, %v596
    %v598 = vmul.f32 %v577, 0.0
    %v599 = vmul.f32 %v558, %v578
    %v600 = vadd.f32 %v598, %v599
    %v601 = vtanh.pop %v600
    %v602 = vmul.f32 %v597, %v601
    %s603 = smul.u32 1, 4
    %s604 = smul.addr %s603, 8
    %s605 = scalar_lea.vmem [#allocation2], %s604
    %v606 = vld [vmem:[%s605] sm:$0xff]
    %v607 = vld [vmem:[%s605 + $0x8] sm:$0xff]
    %v608 = vld [vmem:[%s605 + $0x10] sm:$0xff]
    %v609 = vld [vmem:[%s605 + $0x18] sm:$0xff]
    %610 = vmatpush.msra.mxu0 %v452
    %611 = vmatpush.msra.mxu0 %v448
    %612 = vmatpush.msra.mxu0 %v444
    %613 = vmatpush.msra.mxu0 %v440
    %614 = vmatpush.msra.mxu0 %v436
    %615 = vmatpush.msra.mxu0 %v432
    %616 = vmatpush.msra.mxu0 %v428
    %617 = vmatpush.msra.mxu0 %v424
    %618 = vmatpush.msra.mxu0 %v420
    %619 = vmatpush.msra.mxu0 %v416
    %620 = vmatpush.msra.mxu0 %v412
    %621 = vmatpush.msra.mxu0 %v408
    %622 = vmatpush.msra.mxu0 %v404
    %623 = vmatpush.msra.mxu0 %v400
    %624 = vmatpush.msra.mxu0 %v396
    %625 = vmatpush.msra.mxu0 %v392
    %626 = vmatmul.f32.gmra.mxu0 %v602
    %v627 = vpop.f32.mrf.mxu0
    %v628 = vadd.f32 0.0, %v627
    %629 = vdwg.mxu0
    %630 = vmatpush.msra.mxu0 %v453
    %631 = vmatpush.msra.mxu0 %v449
    %632 = vmatpush.msra.mxu0 %v445
    %633 = vmatpush.msra.mxu0 %v441
    %634 = vmatpush.msra.mxu0 %v437
    %635 = vmatpush.msra.mxu0 %v433
    %636 = vmatpush.msra.mxu0 %v429
    %637 = vmatpush.msra.mxu0 %v425
    %638 = vmatpush.msra.mxu0 %v421
    %639 = vmatpush.msra.mxu0 %v417
    %640 = vmatpush.msra.mxu0 %v413
    %641 = vmatpush.msra.mxu0 %v409
    %642 = vmatpush.msra.mxu0 %v405
    %643 = vmatpush.msra.mxu0 %v401
    %644 = vmatpush.msra.mxu0 %v397
    %645 = vmatpush.msra.mxu0 %v393
    %646 = vmatmul.f32.gmra.mxu0 %v602
    %v647 = vpop.f32.mrf.mxu0
    %v648 = vadd.f32 0.0, %v647
    %649 = vdwg.mxu0
    %650 = vmatpush.msra.mxu0 %v454
    %651 = vmatpush.msra.mxu0 %v450
    %652 = vmatpush.msra.mxu0 %v446
    %653 = vmatpush.msra.mxu0 %v442
    %654 = vmatpush.msra.mxu0 %v438
    %655 = vmatpush.msra.mxu0 %v434
    %656 = vmatpush.msra.mxu0 %v430
    %657 = vmatpush.msra.mxu0 %v426
    %658 = vmatpush.msra.mxu0 %v422
    %659 = vmatpush.msra.mxu0 %v418
    %660 = vmatpush.msra.mxu0 %v414
    %661 = vmatpush.msra.mxu0 %v410
    %662 = vmatpush.msra.mxu0 %v406
    %663 = vmatpush.msra.mxu0 %v402
    %664 = vmatpush.msra.mxu0 %v398
    %665 = vmatpush.msra.mxu0 %v394
    %666 = vmatmul.f32.gmra.mxu0 %v602
    %v667 = vpop.f32.mrf.mxu0
    %v668 = vadd.f32 0.0, %v667
    %669 = vdwg.mxu0
    %670 = vmatpush.msra.mxu0 %v455
    %671 = vmatpush.msra.mxu0 %v451
    %672 = vmatpush.msra.mxu0 %v447
    %673 = vmatpush.msra.mxu0 %v443
    %674 = vmatpush.msra.mxu0 %v439
    %675 = vmatpush.msra.mxu0 %v435
    %676 = vmatpush.msra.mxu0 %v431
    %677 = vmatpush.msra.mxu0 %v427
    %678 = vmatpush.msra.mxu0 %v423
    %679 = vmatpush.msra.mxu0 %v419
    %680 = vmatpush.msra.mxu0 %v415
    %681 = vmatpush.msra.mxu0 %v411
    %682 = vmatpush.msra.mxu0 %v407
    %683 = vmatpush.msra.mxu0 %v403
    %684 = vmatpush.msra.mxu0 %v399
    %685 = vmatpush.msra.mxu0 %v395
    %686 = vmatmul.f32.gmra.mxu0 %v602
    %v687 = vpop.f32.mrf.mxu0
    %v688 = vadd.f32 0.0, %v687
    %689 = vdwg.mxu0
    %v690 = vadd.f32 %v606, %v628
    %v691 = vadd.f32 %v607, %v648
    %v692 = vadd.f32 %v608, %v668
    %v693 = vadd.f32 %v609, %v688
    %v694 = vxor.u32 %v690, 2147483648
    %v695 = vmul.f32 %v694, 1.442695
    %v696 = vpow.pop %v695
    %v697 = vadd.f32 %v696, 1.0
    %v698 = vrcp.pop %v697
    %v699 = vmul.f32 %v697, %v698
    %v700 = vsub.f32 1.0, %v699
    %v701 = vmul.f32 %v698, %v700
    %v702 = vadd.f32 %v698, %v701
    %vm703 = vweird.f32 %v697
    %vm704 = vweird.f32 %v698
    %vm705 = vmor %vm703, %vm704
    %v706 = vsel %vm705, %v698, %v702
    %v707 = vand.u32 2147483647, %v697
    %vm708 = vcmp.eq.f32.partialorder %v707, 8.507059e+37
    %v709 = vand.u32 %v697, 2147483648
    %v710 = vor.u32 1.1754944e-38, %v709
    %v711 = vsel %vm708, %v710, %v706
    %v712 = vmul.f32 1.0, %v711
    %v713 = vxor.u32 %v691, 2147483648
    %v714 = vmul.f32 %v713, 1.442695
    %v715 = vpow.pop %v714
    %v716 = vadd.f32 %v715, 1.0
    %v717 = vrcp.pop %v716
    %v718 = vmul.f32 %v716, %v717
    %v719 = vsub.f32 1.0, %v718
    %v720 = vmul.f32 %v717, %v719
    %v721 = vadd.f32 %v717, %v720
    %vm722 = vweird.f32 %v716
    %vm723 = vweird.f32 %v717
    %vm724 = vmor %vm722, %vm723
    %v725 = vsel %vm724, %v717, %v721
    %v726 = vand.u32 2147483647, %v716
    %vm727 = vcmp.eq.f32.partialorder %v726, 8.507059e+37
    %v728 = vand.u32 %v716, 2147483648
    %v729 = vor.u32 1.1754944e-38, %v728
    %v730 = vsel %vm727, %v729, %v725
    %v731 = vmul.f32 1.0, %v730
    %v732 = vtanh.pop %v692
    %v733 = vxor.u32 %v693, 2147483648
    %v734 = vmul.f32 %v733, 1.442695
    %v735 = vpow.pop %v734
    %v736 = vadd.f32 %v735, 1.0
    %v737 = vrcp.pop %v736
    %v738 = vmul.f32 %v736, %v737
    %v739 = vsub.f32 1.0, %v738
    %v740 = vmul.f32 %v737, %v739
    %v741 = vadd.f32 %v737, %v740
    %vm742 = vweird.f32 %v736
    %vm743 = vweird.f32 %v737
    %vm744 = vmor %vm742, %vm743
    %v745 = vsel %vm744, %v737, %v741
    %v746 = vand.u32 2147483647, %v736
    %vm747 = vcmp.eq.f32.partialorder %v746, 8.507059e+37
    %v748 = vand.u32 %v736, 2147483648
    %v749 = vor.u32 1.1754944e-38, %v748
    %v750 = vsel %vm747, %v749, %v745
    %v751 = vmul.f32 1.0, %v750
    %v752 = vmul.f32 %v731, %v600
    %v753 = vmul.f32 %v712, %v732
    %v754 = vadd.f32 %v752, %v753
    %v755 = vtanh.pop %v754
    %v756 = vmul.f32 %v751, %v755
    %s757 = smul.u32 2, 4
    %s758 = smul.addr %s757, 8
    %s759 = scalar_lea.vmem [#allocation2], %s758
    %v760 = vld [vmem:[%s759] sm:$0xff]
    %v761 = vld [vmem:[%s759 + $0x8] sm:$0xff]
    %v762 = vld [vmem:[%s759 + $0x10] sm:$0xff]
    %v763 = vld [vmem:[%s759 + $0x18] sm:$0xff]
    %764 = vmatpush.msra.mxu0 %v452
    %765 = vmatpush.msra.mxu0 %v448
    %766 = vmatpush.msra.mxu0 %v444
    %767 = vmatpush.msra.mxu0 %v440
    %768 = vmatpush.msra.mxu0 %v436
    %769 = vmatpush.msra.mxu0 %v432
    %770 = vmatpush.msra.mxu0 %v428
    %771 = vmatpush.msra.mxu0 %v424
    %772 = vmatpush.msra.mxu0 %v420
    %773 = vmatpush.msra.mxu0 %v416
    %774 = vmatpush.msra.mxu0 %v412
    %775 = vmatpush.msra.mxu0 %v408
    %776 = vmatpush.msra.mxu0 %v404
    %777 = vmatpush.msra.mxu0 %v400
    %778 = vmatpush.msra.mxu0 %v396
    %779 = vmatpush.msra.mxu0 %v392
    %780 = vmatmul.f32.gmra.mxu0 %v756
    %v781 = vpop.f32.mrf.mxu0
    %v782 = vadd.f32 0.0, %v781
    %783 = vdwg.mxu0
    %784 = vmatpush.msra.mxu0 %v453
    %785 = vmatpush.msra.mxu0 %v449
    %786 = vmatpush.msra.mxu0 %v445
    %787 = vmatpush.msra.mxu0 %v441
    %788 = vmatpush.msra.mxu0 %v437
    %789 = vmatpush.msra.mxu0 %v433
    %790 = vmatpush.msra.mxu0 %v429
    %791 = vmatpush.msra.mxu0 %v425
    %792 = vmatpush.msra.mxu0 %v421
    %793 = vmatpush.msra.mxu0 %v417
    %794 = vmatpush.msra.mxu0 %v413
    %795 = vmatpush.msra.mxu0 %v409
    %796 = vmatpush.msra.mxu0 %v405
    %797 = vmatpush.msra.mxu0 %v401
    %798 = vmatpush.msra.mxu0 %v397
    %799 = vmatpush.msra.mxu0 %v393
    %800 = vmatmul.f32.gmra.mxu0 %v756
    %v801 = vpop.f32.mrf.mxu0
    %v802 = vadd.f32 0.0, %v801
    %803 = vdwg.mxu0
    %804 = vmatpush.msra.mxu0 %v454
    %805 = vmatpush.msra.mxu0 %v450
    %806 = vmatpush.msra.mxu0 %v446
    %807 = vmatpush.msra.mxu0 %v442
    %808 = vmatpush.msra.mxu0 %v438
    %809 = vmatpush.msra.mxu0 %v434
    %810 = vmatpush.msra.mxu0 %v430
    %811 = vmatpush.msra.mxu0 %v426
    %812 = vmatpush.msra.mxu0 %v422
    %813 = vmatpush.msra.mxu0 %v418
    %814 = vmatpush.msra.mxu0 %v414
    %815 = vmatpush.msra.mxu0 %v410
    %816 = vmatpush.msra.mxu0 %v406
    %817 = vmatpush.msra.mxu0 %v402
    %818 = vmatpush.msra.mxu0 %v398
    %819 = vmatpush.msra.mxu0 %v394
    %820 = vmatmul.f32.gmra.mxu0 %v756
    %v821 = vpop.f32.mrf.mxu0
    %v822 = vadd.f32 0.0, %v821
    %823 = vdwg.mxu0
    %824 = vmatpush.msra.mxu0 %v455
    %825 = vmatpush.msra.mxu0 %v451
    %826 = vmatpush.msra.mxu0 %v447
    %827 = vmatpush.msra.mxu0 %v443
    %828 = vmatpush.msra.mxu0 %v439
    %829 = vmatpush.msra.mxu0 %v435
    %830 = vmatpush.msra.mxu0 %v431
    %831 = vmatpush.msra.mxu0 %v427
    %832 = vmatpush.msra.mxu0 %v423
    %833 = vmatpush.msra.mxu0 %v419
    %834 = vmatpush.msra.mxu0 %v415
    %835 = vmatpush.msra.mxu0 %v411
    %836 = vmatpush.msra.mxu0 %v407
    %837 = vmatpush.msra.mxu0 %v403
    %838 = vmatpush.msra.mxu0 %v399
    %839 = vmatpush.msra.mxu0 %v395
    %840 = vmatmul.f32.gmra.mxu0 %v756
    %v841 = vpop.f32.mrf.mxu0
    %v842 = vadd.f32 0.0, %v841
    %843 = vdwg.mxu0
    %v844 = vadd.f32 %v760, %v782
    %v845 = vadd.f32 %v761, %v802
    %v846 = vadd.f32 %v762, %v822
    %v847 = vadd.f32 %v763, %v842
    %v848 = vxor.u32 %v844, 2147483648
    %v849 = vmul.f32 %v848, 1.442695
    %v850 = vpow.pop %v849
    %v851 = vadd.f32 %v850, 1.0
    %v852 = vrcp.pop %v851
    %v853 = vmul.f32 %v851, %v852
    %v854 = vsub.f32 1.0, %v853
    %v855 = vmul.f32 %v852, %v854
    %v856 = vadd.f32 %v852, %v855
    %vm857 = vweird.f32 %v851
    %vm858 = vweird.f32 %v852
    %vm859 = vmor %vm857, %vm858
    %v860 = vsel %vm859, %v852, %v856
    %v861 = vand.u32 2147483647, %v851
    %vm862 = vcmp.eq.f32.partialorder %v861, 8.507059e+37
    %v863 = vand.u32 %v851, 2147483648
    %v864 = vor.u32 1.1754944e-38, %v863
    %v865 = vsel %vm862, %v864, %v860
    %v866 = vmul.f32 1.0, %v865
    %v867 = vxor.u32 %v845, 2147483648
    %v868 = vmul.f32 %v867, 1.442695
    %v869 = vpow.pop %v868
    %v870 = vadd.f32 %v869, 1.0
    %v871 = vrcp.pop %v870
    %v872 = vmul.f32 %v870, %v871
    %v873 = vsub.f32 1.0, %v872
    %v874 = vmul.f32 %v871, %v873
    %v875 = vadd.f32 %v871, %v874
    %vm876 = vweird.f32 %v870
    %vm877 = vweird.f32 %v871
    %vm878 = vmor %vm876, %vm877
    %v879 = vsel %vm878, %v871, %v875
    %v880 = vand.u32 2147483647, %v870
    %vm881 = vcmp.eq.f32.partialorder %v880, 8.507059e+37
    %v882 = vand.u32 %v870, 2147483648
    %v883 = vor.u32 1.1754944e-38, %v882
    %v884 = vsel %vm881, %v883, %v879
    %v885 = vmul.f32 1.0, %v884
    %v886 = vtanh.pop %v846
    %v887 = vxor.u32 %v847, 2147483648
    %v888 = vmul.f32 %v887, 1.442695
    %v889 = vpow.pop %v888
    %v890 = vadd.f32 %v889, 1.0
    %v891 = vrcp.pop %v890
    %v892 = vmul.f32 %v890, %v891
    %v893 = vsub.f32 1.0, %v892
    %v894 = vmul.f32 %v891, %v893
    %v895 = vadd.f32 %v891, %v894
    %vm896 = vweird.f32 %v890
    %vm897 = vweird.f32 %v891
    %vm898 = vmor %vm896, %vm897
    %v899 = vsel %vm898, %v891, %v895
    %v900 = vand.u32 2147483647, %v890
    %vm901 = vcmp.eq.f32.partialorder %v900, 8.507059e+37
    %v902 = vand.u32 %v890, 2147483648
    %v903 = vor.u32 1.1754944e-38, %v902
    %v904 = vsel %vm901, %v903, %v899
    %v905 = vmul.f32 1.0, %v904
    %v906 = vmul.f32 %v885, %v754
    %v907 = vmul.f32 %v866, %v886
    %v908 = vadd.f32 %v906, %v907
    %v909 = vtanh.pop %v908
    %v910 = vmul.f32 %v905, %v909
    %s911 = smul.u32 3, 4
    %s912 = smul.addr %s911, 8
    %s913 = scalar_lea.vmem [#allocation2], %s912
    %v914 = vld [vmem:[%s913] sm:$0xff]
    %v915 = vld [vmem:[%s913 + $0x8] sm:$0xff]
    %v916 = vld [vmem:[%s913 + $0x10] sm:$0xff]
    %v917 = vld [vmem:[%s913 + $0x18] sm:$0xff]
    %918 = vmatpush.msra.mxu0 %v452
    %919 = vmatpush.msra.mxu0 %v448
    %920 = vmatpush.msra.mxu0 %v444
    %921 = vmatpush.msra.mxu0 %v440
    %922 = vmatpush.msra.mxu0 %v436
    %923 = vmatpush.msra.mxu0 %v432
    %924 = vmatpush.msra.mxu0 %v428
    %925 = vmatpush.msra.mxu0 %v424
    %926 = vmatpush.msra.mxu0 %v420
    %927 = vmatpush.msra.mxu0 %v416
    %928 = vmatpush.msra.mxu0 %v412
    %929 = vmatpush.msra.mxu0 %v408
    %930 = vmatpush.msra.mxu0 %v404
    %931 = vmatpush.msra.mxu0 %v400
    %932 = vmatpush.msra.mxu0 %v396
    %933 = vmatpush.msra.mxu0 %v392
    %934 = vmatmul.f32.gmra.mxu0 %v910
    %v935 = vpop.f32.mrf.mxu0
    %v936 = vadd.f32 0.0, %v935
    %937 = vdwg.mxu0
    %938 = vmatpush.msra.mxu0 %v453
    %939 = vmatpush.msra.mxu0 %v449
    %940 = vmatpush.msra.mxu0 %v445
    %941 = vmatpush.msra.mxu0 %v441
    %942 = vmatpush.msra.mxu0 %v437
    %943 = vmatpush.msra.mxu0 %v433
    %944 = vmatpush.msra.mxu0 %v429
    %945 = vmatpush.msra.mxu0 %v425
    %946 = vmatpush.msra.mxu0 %v421
    %947 = vmatpush.msra.mxu0 %v417
    %948 = vmatpush.msra.mxu0 %v413
    %949 = vmatpush.msra.mxu0 %v409
    %950 = vmatpush.msra.mxu0 %v405
    %951 = vmatpush.msra.mxu0 %v401
    %952 = vmatpush.msra.mxu0 %v397
    %953 = vmatpush.msra.mxu0 %v393
    %954 = vmatmul.f32.gmra.mxu0 %v910
    %v955 = vpop.f32.mrf.mxu0
    %v956 = vadd.f32 0.0, %v955
    %957 = vdwg.mxu0
    %958 = vmatpush.msra.mxu0 %v454
    %959 = vmatpush.msra.mxu0 %v450
    %960 = vmatpush.msra.mxu0 %v446
    %961 = vmatpush.msra.mxu0 %v442
    %962 = vmatpush.msra.mxu0 %v438
    %963 = vmatpush.msra.mxu0 %v434
    %964 = vmatpush.msra.mxu0 %v430
    %965 = vmatpush.msra.mxu0 %v426
    %966 = vmatpush.msra.mxu0 %v422
    %967 = vmatpush.msra.mxu0 %v418
    %968 = vmatpush.msra.mxu0 %v414
    %969 = vmatpush.msra.mxu0 %v410
    %970 = vmatpush.msra.mxu0 %v406
    %971 = vmatpush.msra.mxu0 %v402
    %972 = vmatpush.msra.mxu0 %v398
    %973 = vmatpush.msra.mxu0 %v394
    %974 = vmatmul.f32.gmra.mxu0 %v910
    %v975 = vpop.f32.mrf.mxu0
    %v976 = vadd.f32 0.0, %v975
    %977 = vdwg.mxu0
    %978 = vmatpush.msra.mxu0 %v455
    %979 = vmatpush.msra.mxu0 %v451
    %980 = vmatpush.msra.mxu0 %v447
    %981 = vmatpush.msra.mxu0 %v443
    %982 = vmatpush.msra.mxu0 %v439
    %983 = vmatpush.msra.mxu0 %v435
    %984 = vmatpush.msra.mxu0 %v431
    %985 = vmatpush.msra.mxu0 %v427
    %986 = vmatpush.msra.mxu0 %v423
    %987 = vmatpush.msra.mxu0 %v419
    %988 = vmatpush.msra.mxu0 %v415
    %989 = vmatpush.msra.mxu0 %v411
    %990 = vmatpush.msra.mxu0 %v407
    %991 = vmatpush.msra.mxu0 %v403
    %992 = vmatpush.msra.mxu0 %v399
    %993 = vmatpush.msra.mxu0 %v395
    %994 = vmatmul.f32.gmra.mxu0 %v910
    %v995 = vpop.f32.mrf.mxu0
    %v996 = vadd.f32 0.0, %v995
    %997 = vdwg.mxu0
    %v998 = vadd.f32 %v914, %v936
    %v999 = vadd.f32 %v915, %v956
    %v1000 = vadd.f32 %v916, %v976
    %v1001 = vadd.f32 %v917, %v996
    %v1002 = vxor.u32 %v998, 2147483648
    %v1003 = vmul.f32 %v1002, 1.442695
    %v1004 = vpow.pop %v1003
    %v1005 = vadd.f32 %v1004, 1.0
    %v1006 = vrcp.pop %v1005
    %v1007 = vmul.f32 %v1005, %v1006
    %v1008 = vsub.f32 1.0, %v1007
    %v1009 = vmul.f32 %v1006, %v1008
    %v1010 = vadd.f32 %v1006, %v1009
    %vm1011 = vweird.f32 %v1005
    %vm1012 = vweird.f32 %v1006
    %vm1013 = vmor %vm1011, %vm1012
    %v1014 = vsel %vm1013, %v1006, %v1010
    %v1015 = vand.u32 2147483647, %v1005
    %vm1016 = vcmp.eq.f32.partialorder %v1015, 8.507059e+37
    %v1017 = vand.u32 %v1005, 2147483648
    %v1018 = vor.u32 1.1754944e-38, %v1017
    %v1019 = vsel %vm1016, %v1018, %v1014
    %v1020 = vmul.f32 1.0, %v1019
    %v1021 = vxor.u32 %v999, 2147483648
    %v1022 = vmul.f32 %v1021, 1.442695
    %v1023 = vpow.pop %v1022
    %v1024 = vadd.f32 %v1023, 1.0
    %v1025 = vrcp.pop %v1024
    %v1026 = vmul.f32 %v1024, %v1025
    %v1027 = vsub.f32 1.0, %v1026
    %v1028 = vmul.f32 %v1025, %v1027
    %v1029 = vadd.f32 %v1025, %v1028
    %vm1030 = vweird.f32 %v1024
    %vm1031 = vweird.f32 %v1025
    %vm1032 = vmor %vm1030, %vm1031
    %v1033 = vsel %vm1032, %v1025, %v1029
    %v1034 = vand.u32 2147483647, %v1024
    %vm1035 = vcmp.eq.f32.partialorder %v1034, 8.507059e+37
    %v1036 = vand.u32 %v1024, 2147483648
    %v1037 = vor.u32 1.1754944e-38, %v1036
    %v1038 = vsel %vm1035, %v1037, %v1033
    %v1039 = vmul.f32 1.0, %v1038
    %v1040 = vtanh.pop %v1000
    %v1041 = vxor.u32 %v1001, 2147483648
    %v1042 = vmul.f32 %v1041, 1.442695
    %v1043 = vpow.pop %v1042
    %v1044 = vadd.f32 %v1043, 1.0
    %v1045 = vrcp.pop %v1044
    %v1046 = vmul.f32 %v1044, %v1045
    %v1047 = vsub.f32 1.0, %v1046
    %v1048 = vmul.f32 %v1045, %v1047
    %v1049 = vadd.f32 %v1045, %v1048
    %vm1050 = vweird.f32 %v1044
    %vm1051 = vweird.f32 %v1045
    %vm1052 = vmor %vm1050, %vm1051
    %v1053 = vsel %vm1052, %v1045, %v1049
    %v1054 = vand.u32 2147483647, %v1044
    %vm1055 = vcmp.eq.f32.partialorder %v1054, 8.507059e+37
    %v1056 = vand.u32 %v1044, 2147483648
    %v1057 = vor.u32 1.1754944e-38, %v1056
    %v1058 = vsel %vm1055, %v1057, %v1053
    %v1059 = vmul.f32 1.0, %v1058
    %v1060 = vmul.f32 %v1039, %v908
    %v1061 = vmul.f32 %v1020, %v1040
    %v1062 = vadd.f32 %v1060, %v1061
    %v1063 = vtanh.pop %v1062
    %v1064 = vmul.f32 %v1059, %v1063
    %s1065 = smul.u32 4, 4
    %s1066 = smul.addr %s1065, 8
    %s1067 = scalar_lea.vmem [#allocation2], %s1066
    %v1068 = vld [vmem:[%s1067] sm:$0xff]
    %v1069 = vld [vmem:[%s1067 + $0x8] sm:$0xff]
    %v1070 = vld [vmem:[%s1067 + $0x10] sm:$0xff]
    %v1071 = vld [vmem:[%s1067 + $0x18] sm:$0xff]
    %1072 = vmatpush.msra.mxu0 %v452
    %1073 = vmatpush.msra.mxu0 %v448
    %1074 = vmatpush.msra.mxu0 %v444
    %1075 = vmatpush.msra.mxu0 %v440
    %1076 = vmatpush.msra.mxu0 %v436
    %1077 = vmatpush.msra.mxu0 %v432
    %1078 = vmatpush.msra.mxu0 %v428
    %1079 = vmatpush.msra.mxu0 %v424
    %1080 = vmatpush.msra.mxu0 %v420
    %1081 = vmatpush.msra.mxu0 %v416
    %1082 = vmatpush.msra.mxu0 %v412
    %1083 = vmatpush.msra.mxu0 %v408
    %1084 = vmatpush.msra.mxu0 %v404
    %1085 = vmatpush.msra.mxu0 %v400
    %1086 = vmatpush.msra.mxu0 %v396
    %1087 = vmatpush.msra.mxu0 %v392
    %1088 = vmatmul.f32.gmra.mxu0 %v1064
    %v1089 = vpop.f32.mrf.mxu0
    %v1090 = vadd.f32 0.0, %v1089
    %1091 = vdwg.mxu0
    %1092 = vmatpush.msra.mxu0 %v453
    %1093 = vmatpush.msra.mxu0 %v449
    %1094 = vmatpush.msra.mxu0 %v445
    %1095 = vmatpush.msra.mxu0 %v441
    %1096 = vmatpush.msra.mxu0 %v437
    %1097 = vmatpush.msra.mxu0 %v433
    %1098 = vmatpush.msra.mxu0 %v429
    %1099 = vmatpush.msra.mxu0 %v425
    %1100 = vmatpush.msra.mxu0 %v421
    %1101 = vmatpush.msra.mxu0 %v417
    %1102 = vmatpush.msra.mxu0 %v413
    %1103 = vmatpush.msra.mxu0 %v409
    %1104 = vmatpush.msra.mxu0 %v405
    %1105 = vmatpush.msra.mxu0 %v401
    %1106 = vmatpush.msra.mxu0 %v397
    %1107 = vmatpush.msra.mxu0 %v393
    %1108 = vmatmul.f32.gmra.mxu0 %v1064
    %v1109 = vpop.f32.mrf.mxu0
    %v1110 = vadd.f32 0.0, %v1109
    %1111 = vdwg.mxu0
    %1112 = vmatpush.msra.mxu0 %v454
    %1113 = vmatpush.msra.mxu0 %v450
    %1114 = vmatpush.msra.mxu0 %v446
    %1115 = vmatpush.msra.mxu0 %v442
    %1116 = vmatpush.msra.mxu0 %v438
    %1117 = vmatpush.msra.mxu0 %v434
    %1118 = vmatpush.msra.mxu0 %v430
    %1119 = vmatpush.msra.mxu0 %v426
    %1120 = vmatpush.msra.mxu0 %v422
    %1121 = vmatpush.msra.mxu0 %v418
    %1122 = vmatpush.msra.mxu0 %v414
    %1123 = vmatpush.msra.mxu0 %v410
    %1124 = vmatpush.msra.mxu0 %v406
    %1125 = vmatpush.msra.mxu0 %v402
    %1126 = vmatpush.msra.mxu0 %v398
    %1127 = vmatpush.msra.mxu0 %v394
    %1128 = vmatmul.f32.gmra.mxu0 %v1064
    %v1129 = vpop.f32.mrf.mxu0
    %v1130 = vadd.f32 0.0, %v1129
    %1131 = vdwg.mxu0
    %1132 = vmatpush.msra.mxu0 %v455
    %1133 = vmatpush.msra.mxu0 %v451
    %1134 = vmatpush.msra.mxu0 %v447
    %1135 = vmatpush.msra.mxu0 %v443
    %1136 = vmatpush.msra.mxu0 %v439
    %1137 = vmatpush.msra.mxu0 %v435
    %1138 = vmatpush.msra.mxu0 %v431
    %1139 = vmatpush.msra.mxu0 %v427
    %1140 = vmatpush.msra.mxu0 %v423
    %1141 = vmatpush.msra.mxu0 %v419
    %1142 = vmatpush.msra.mxu0 %v415
    %1143 = vmatpush.msra.mxu0 %v411
    %1144 = vmatpush.msra.mxu0 %v407
    %1145 = vmatpush.msra.mxu0 %v403
    %1146 = vmatpush.msra.mxu0 %v399
    %1147 = vmatpush.msra.mxu0 %v395
    %1148 = vmatmul.f32.gmra.mxu0 %v1064
    %v1149 = vpop.f32.mrf.mxu0
    %v1150 = vadd.f32 0.0, %v1149
    %1151 = vdwg.mxu0
    %v1152 = vadd.f32 %v1068, %v1090
    %v1153 = vadd.f32 %v1069, %v1110
    %v1154 = vadd.f32 %v1070, %v1130
    %v1155 = vadd.f32 %v1071, %v1150
    %v1156 = vxor.u32 %v1152, 2147483648
    %v1157 = vmul.f32 %v1156, 1.442695
    %v1158 = vpow.pop %v1157
    %v1159 = vadd.f32 %v1158, 1.0
    %v1160 = vrcp.pop %v1159
    %v1161 = vmul.f32 %v1159, %v1160
    %v1162 = vsub.f32 1.0, %v1161
    %v1163 = vmul.f32 %v1160, %v1162
    %v1164 = vadd.f32 %v1160, %v1163
    %vm1165 = vweird.f32 %v1159
    %vm1166 = vweird.f32 %v1160
    %vm1167 = vmor %vm1165, %vm1166
    %v1168 = vsel %vm1167, %v1160, %v1164
    %v1169 = vand.u32 2147483647, %v1159
    %vm1170 = vcmp.eq.f32.partialorder %v1169, 8.507059e+37
    %v1171 = vand.u32 %v1159, 2147483648
    %v1172 = vor.u32 1.1754944e-38, %v1171
    %v1173 = vsel %vm1170, %v1172, %v1168
    %v1174 = vmul.f32 1.0, %v1173
    %v1175 = vxor.u32 %v1153, 2147483648
    %v1176 = vmul.f32 %v1175, 1.442695
    %v1177 = vpow.pop %v1176
    %v1178 = vadd.f32 %v1177, 1.0
    %v1179 = vrcp.pop %v1178
    %v1180 = vmul.f32 %v1178, %v1179
    %v1181 = vsub.f32 1.0, %v1180
    %v1182 = vmul.f32 %v1179, %v1181
    %v1183 = vadd.f32 %v1179, %v1182
    %vm1184 = vweird.f32 %v1178
    %vm1185 = vweird.f32 %v1179
    %vm1186 = vmor %vm1184, %vm1185
    %v1187 = vsel %vm1186, %v1179, %v1183
    %v1188 = vand.u32 2147483647, %v1178
    %vm1189 = vcmp.eq.f32.partialorder %v1188, 8.507059e+37
    %v1190 = vand.u32 %v1178, 2147483648
    %v1191 = vor.u32 1.1754944e-38, %v1190
    %v1192 = vsel %vm1189, %v1191, %v1187
    %v1193 = vmul.f32 1.0, %v1192
    %v1194 = vtanh.pop %v1154
    %v1195 = vxor.u32 %v1155, 2147483648
    %v1196 = vmul.f32 %v1195, 1.442695
    %v1197 = vpow.pop %v1196
    %v1198 = vadd.f32 %v1197, 1.0
    %v1199 = vrcp.pop %v1198
    %v1200 = vmul.f32 %v1198, %v1199
    %v1201 = vsub.f32 1.0, %v1200
    %v1202 = vmul.f32 %v1199, %v1201
    %v1203 = vadd.f32 %v1199, %v1202
    %vm1204 = vweird.f32 %v1198
    %vm1205 = vweird.f32 %v1199
    %vm1206 = vmor %vm1204, %vm1205
    %v1207 = vsel %vm1206, %v1199, %v1203
    %v1208 = vand.u32 2147483647, %v1198
    %vm1209 = vcmp.eq.f32.partialorder %v1208, 8.507059e+37
    %v1210 = vand.u32 %v1198, 2147483648
    %v1211 = vor.u32 1.1754944e-38, %v1210
    %v1212 = vsel %vm1209, %v1211, %v1207
    %v1213 = vmul.f32 1.0, %v1212
    %v1214 = vmul.f32 %v1193, %v1062
    %v1215 = vmul.f32 %v1174, %v1194
    %v1216 = vadd.f32 %v1214, %v1215
    %v1217 = vtanh.pop %v1216
    %v1218 = vmul.f32 %v1213, %v1217
    %s1219 = smul.u32 5, 4
    %s1220 = smul.addr %s1219, 8
    %s1221 = scalar_lea.vmem [#allocation2], %s1220
    %v1222 = vld [vmem:[%s1221] sm:$0xff]
    %v1223 = vld [vmem:[%s1221 + $0x8] sm:$0xff]
    %v1224 = vld [vmem:[%s1221 + $0x10] sm:$0xff]
    %v1225 = vld [vmem:[%s1221 + $0x18] sm:$0xff]
    %1226 = vmatpush.msra.mxu0 %v452
    %1227 = vmatpush.msra.mxu0 %v448
    %1228 = vmatpush.msra.mxu0 %v444
    %1229 = vmatpush.msra.mxu0 %v440
    %1230 = vmatpush.msra.mxu0 %v436
    %1231 = vmatpush.msra.mxu0 %v432
    %1232 = vmatpush.msra.mxu0 %v428
    %1233 = vmatpush.msra.mxu0 %v424
    %1234 = vmatpush.msra.mxu0 %v420
    %1235 = vmatpush.msra.mxu0 %v416
    %1236 = vmatpush.msra.mxu0 %v412
    %1237 = vmatpush.msra.mxu0 %v408
    %1238 = vmatpush.msra.mxu0 %v404
    %1239 = vmatpush.msra.mxu0 %v400
    %1240 = vmatpush.msra.mxu0 %v396
    %1241 = vmatpush.msra.mxu0 %v392
    %1242 = vmatmul.f32.gmra.mxu0 %v1218
    %v1243 = vpop.f32.mrf.mxu0
    %v1244 = vadd.f32 0.0, %v1243
    %1245 = vdwg.mxu0
    %1246 = vmatpush.msra.mxu0 %v453
    %1247 = vmatpush.msra.mxu0 %v449
    %1248 = vmatpush.msra.mxu0 %v445
    %1249 = vmatpush.msra.mxu0 %v441
    %1250 = vmatpush.msra.mxu0 %v437
    %1251 = vmatpush.msra.mxu0 %v433
    %1252 = vmatpush.msra.mxu0 %v429
    %1253 = vmatpush.msra.mxu0 %v425
    %1254 = vmatpush.msra.mxu0 %v421
    %1255 = vmatpush.msra.mxu0 %v417
    %1256 = vmatpush.msra.mxu0 %v413
    %1257 = vmatpush.msra.mxu0 %v409
    %1258 = vmatpush.msra.mxu0 %v405
    %1259 = vmatpush.msra.mxu0 %v401
    %1260 = vmatpush.msra.mxu0 %v397
    %1261 = vmatpush.msra.mxu0 %v393
    %1262 = vmatmul.f32.gmra.mxu0 %v1218
    %v1263 = vpop.f32.mrf.mxu0
    %v1264 = vadd.f32 0.0, %v1263
    %1265 = vdwg.mxu0
    %1266 = vmatpush.msra.mxu0 %v454
    %1267 = vmatpush.msra.mxu0 %v450
    %1268 = vmatpush.msra.mxu0 %v446
    %1269 = vmatpush.msra.mxu0 %v442
    %1270 = vmatpush.msra.mxu0 %v438
    %1271 = vmatpush.msra.mxu0 %v434
    %1272 = vmatpush.msra.mxu0 %v430
    %1273 = vmatpush.msra.mxu0 %v426
    %1274 = vmatpush.msra.mxu0 %v422
    %1275 = vmatpush.msra.mxu0 %v418
    %1276 = vmatpush.msra.mxu0 %v414
    %1277 = vmatpush.msra.mxu0 %v410
    %1278 = vmatpush.msra.mxu0 %v406
    %1279 = vmatpush.msra.mxu0 %v402
    %1280 = vmatpush.msra.mxu0 %v398
    %1281 = vmatpush.msra.mxu0 %v394
    %1282 = vmatmul.f32.gmra.mxu0 %v1218
    %v1283 = vpop.f32.mrf.mxu0
    %v1284 = vadd.f32 0.0, %v1283
    %1285 = vdwg.mxu0
    %1286 = vmatpush.msra.mxu0 %v455
    %1287 = vmatpush.msra.mxu0 %v451
    %1288 = vmatpush.msra.mxu0 %v447
    %1289 = vmatpush.msra.mxu0 %v443
    %1290 = vmatpush.msra.mxu0 %v439
    %1291 = vmatpush.msra.mxu0 %v435
    %1292 = vmatpush.msra.mxu0 %v431
    %1293 = vmatpush.msra.mxu0 %v427
    %1294 = vmatpush.msra.mxu0 %v423
    %1295 = vmatpush.msra.mxu0 %v419
    %1296 = vmatpush.msra.mxu0 %v415
    %1297 = vmatpush.msra.mxu0 %v411
    %1298 = vmatpush.msra.mxu0 %v407
    %1299 = vmatpush.msra.mxu0 %v403
    %1300 = vmatpush.msra.mxu0 %v399
    %1301 = vmatpush.msra.mxu0 %v395
    %1302 = vmatmul.f32.gmra.mxu0 %v1218
    %v1303 = vpop.f32.mrf.mxu0
    %v1304 = vadd.f32 0.0, %v1303
    %1305 = vdwg.mxu0
    %v1306 = vadd.f32 %v1222, %v1244
    %v1307 = vadd.f32 %v1223, %v1264
    %v1308 = vadd.f32 %v1224, %v1284
    %v1309 = vadd.f32 %v1225, %v1304
    %v1310 = vxor.u32 %v1306, 2147483648
    %v1311 = vmul.f32 %v1310, 1.442695
    %v1312 = vpow.pop %v1311
    %v1313 = vadd.f32 %v1312, 1.0
    %v1314 = vrcp.pop %v1313
    %v1315 = vmul.f32 %v1313, %v1314
    %v1316 = vsub.f32 1.0, %v1315
    %v1317 = vmul.f32 %v1314, %v1316
    %v1318 = vadd.f32 %v1314, %v1317
    %vm1319 = vweird.f32 %v1313
    %vm1320 = vweird.f32 %v1314
    %vm1321 = vmor %vm1319, %vm1320
    %v1322 = vsel %vm1321, %v1314, %v1318
    %v1323 = vand.u32 2147483647, %v1313
    %vm1324 = vcmp.eq.f32.partialorder %v1323, 8.507059e+37
    %v1325 = vand.u32 %v1313, 2147483648
    %v1326 = vor.u32 1.1754944e-38, %v1325
    %v1327 = vsel %vm1324, %v1326, %v1322
    %v1328 = vmul.f32 1.0, %v1327
    %v1329 = vxor.u32 %v1307, 2147483648
    %v1330 = vmul.f32 %v1329, 1.442695
    %v1331 = vpow.pop %v1330
    %v1332 = vadd.f32 %v1331, 1.0
    %v1333 = vrcp.pop %v1332
    %v1334 = vmul.f32 %v1332, %v1333
    %v1335 = vsub.f32 1.0, %v1334
    %v1336 = vmul.f32 %v1333, %v1335
    %v1337 = vadd.f32 %v1333, %v1336
    %vm1338 = vweird.f32 %v1332
    %vm1339 = vweird.f32 %v1333
    %vm1340 = vmor %vm1338, %vm1339
    %v1341 = vsel %vm1340, %v1333, %v1337
    %v1342 = vand.u32 2147483647, %v1332
    %vm1343 = vcmp.eq.f32.partialorder %v1342, 8.507059e+37
    %v1344 = vand.u32 %v1332, 2147483648
    %v1345 = vor.u32 1.1754944e-38, %v1344
    %v1346 = vsel %vm1343, %v1345, %v1341
    %v1347 = vmul.f32 1.0, %v1346
    %v1348 = vtanh.pop %v1308
    %v1349 = vxor.u32 %v1309, 2147483648
    %v1350 = vmul.f32 %v1349, 1.442695
    %v1351 = vpow.pop %v1350
    %v1352 = vadd.f32 %v1351, 1.0
    %v1353 = vrcp.pop %v1352
    %v1354 = vmul.f32 %v1352, %v1353
    %v1355 = vsub.f32 1.0, %v1354
    %v1356 = vmul.f32 %v1353, %v1355
    %v1357 = vadd.f32 %v1353, %v1356
    %vm1358 = vweird.f32 %v1352
    %vm1359 = vweird.f32 %v1353
    %vm1360 = vmor %vm1358, %vm1359
    %v1361 = vsel %vm1360, %v1353, %v1357
    %v1362 = vand.u32 2147483647, %v1352
    %vm1363 = vcmp.eq.f32.partialorder %v1362, 8.507059e+37
    %v1364 = vand.u32 %v1352, 2147483648
    %v1365 = vor.u32 1.1754944e-38, %v1364
    %v1366 = vsel %vm1363, %v1365, %v1361
    %v1367 = vmul.f32 1.0, %v1366
    %v1368 = vmul.f32 %v1347, %v1216
    %v1369 = vmul.f32 %v1328, %v1348
    %v1370 = vadd.f32 %v1368, %v1369
    %v1371 = vtanh.pop %v1370
    %v1372 = vmul.f32 %v1367, %v1371
    %s1373 = smul.u32 6, 4
    %s1374 = smul.addr %s1373, 8
    %s1375 = scalar_lea.vmem [#allocation2], %s1374
    %v1376 = vld [vmem:[%s1375] sm:$0xff]
    %v1377 = vld [vmem:[%s1375 + $0x8] sm:$0xff]
    %v1378 = vld [vmem:[%s1375 + $0x10] sm:$0xff]
    %v1379 = vld [vmem:[%s1375 + $0x18] sm:$0xff]
    %1380 = vmatpush.msra.mxu0 %v452
    %1381 = vmatpush.msra.mxu0 %v448
    %1382 = vmatpush.msra.mxu0 %v444
    %1383 = vmatpush.msra.mxu0 %v440
    %1384 = vmatpush.msra.mxu0 %v436
    %1385 = vmatpush.msra.mxu0 %v432
    %1386 = vmatpush.msra.mxu0 %v428
    %1387 = vmatpush.msra.mxu0 %v424
    %1388 = vmatpush.msra.mxu0 %v420
    %1389 = vmatpush.msra.mxu0 %v416
    %1390 = vmatpush.msra.mxu0 %v412
    %1391 = vmatpush.msra.mxu0 %v408
    %1392 = vmatpush.msra.mxu0 %v404
    %1393 = vmatpush.msra.mxu0 %v400
    %1394 = vmatpush.msra.mxu0 %v396
    %1395 = vmatpush.msra.mxu0 %v392
    %1396 = vmatmul.f32.gmra.mxu0 %v1372
    %v1397 = vpop.f32.mrf.mxu0
    %v1398 = vadd.f32 0.0, %v1397
    %1399 = vdwg.mxu0
    %1400 = vmatpush.msra.mxu0 %v453
    %1401 = vmatpush.msra.mxu0 %v449
    %1402 = vmatpush.msra.mxu0 %v445
    %1403 = vmatpush.msra.mxu0 %v441
    %1404 = vmatpush.msra.mxu0 %v437
    %1405 = vmatpush.msra.mxu0 %v433
    %1406 = vmatpush.msra.mxu0 %v429
    %1407 = vmatpush.msra.mxu0 %v425
    %1408 = vmatpush.msra.mxu0 %v421
    %1409 = vmatpush.msra.mxu0 %v417
    %1410 = vmatpush.msra.mxu0 %v413
    %1411 = vmatpush.msra.mxu0 %v409
    %1412 = vmatpush.msra.mxu0 %v405
    %1413 = vmatpush.msra.mxu0 %v401
    %1414 = vmatpush.msra.mxu0 %v397
    %1415 = vmatpush.msra.mxu0 %v393
    %1416 = vmatmul.f32.gmra.mxu0 %v1372
    %v1417 = vpop.f32.mrf.mxu0
    %v1418 = vadd.f32 0.0, %v1417
    %1419 = vdwg.mxu0
    %1420 = vmatpush.msra.mxu0 %v454
    %1421 = vmatpush.msra.mxu0 %v450
    %1422 = vmatpush.msra.mxu0 %v446
    %1423 = vmatpush.msra.mxu0 %v442
    %1424 = vmatpush.msra.mxu0 %v438
    %1425 = vmatpush.msra.mxu0 %v434
    %1426 = vmatpush.msra.mxu0 %v430
    %1427 = vmatpush.msra.mxu0 %v426
    %1428 = vmatpush.msra.mxu0 %v422
    %1429 = vmatpush.msra.mxu0 %v418
    %1430 = vmatpush.msra.mxu0 %v414
    %1431 = vmatpush.msra.mxu0 %v410
    %1432 = vmatpush.msra.mxu0 %v406
    %1433 = vmatpush.msra.mxu0 %v402
    %1434 = vmatpush.msra.mxu0 %v398
    %1435 = vmatpush.msra.mxu0 %v394
    %1436 = vmatmul.f32.gmra.mxu0 %v1372
    %v1437 = vpop.f32.mrf.mxu0
    %v1438 = vadd.f32 0.0, %v1437
    %1439 = vdwg.mxu0
    %1440 = vmatpush.msra.mxu0 %v455
    %1441 = vmatpush.msra.mxu0 %v451
    %1442 = vmatpush.msra.mxu0 %v447
    %1443 = vmatpush.msra.mxu0 %v443
    %1444 = vmatpush.msra.mxu0 %v439
    %1445 = vmatpush.msra.mxu0 %v435
    %1446 = vmatpush.msra.mxu0 %v431
    %1447 = vmatpush.msra.mxu0 %v427
    %1448 = vmatpush.msra.mxu0 %v423
    %1449 = vmatpush.msra.mxu0 %v419
    %1450 = vmatpush.msra.mxu0 %v415
    %1451 = vmatpush.msra.mxu0 %v411
    %1452 = vmatpush.msra.mxu0 %v407
    %1453 = vmatpush.msra.mxu0 %v403
    %1454 = vmatpush.msra.mxu0 %v399
    %1455 = vmatpush.msra.mxu0 %v395
    %1456 = vmatmul.f32.gmra.mxu0 %v1372
    %v1457 = vpop.f32.mrf.mxu0
    %v1458 = vadd.f32 0.0, %v1457
    %1459 = vdwg.mxu0
    %v1460 = vadd.f32 %v1376, %v1398
    %v1461 = vadd.f32 %v1377, %v1418
    %v1462 = vadd.f32 %v1378, %v1438
    %v1463 = vadd.f32 %v1379, %v1458
    %v1464 = vxor.u32 %v1460, 2147483648
    %v1465 = vmul.f32 %v1464, 1.442695
    %v1466 = vpow.pop %v1465
    %v1467 = vadd.f32 %v1466, 1.0
    %v1468 = vrcp.pop %v1467
    %v1469 = vmul.f32 %v1467, %v1468
    %v1470 = vsub.f32 1.0, %v1469
    %v1471 = vmul.f32 %v1468, %v1470
    %v1472 = vadd.f32 %v1468, %v1471
    %vm1473 = vweird.f32 %v1467
    %vm1474 = vweird.f32 %v1468
    %vm1475 = vmor %vm1473, %vm1474
    %v1476 = vsel %vm1475, %v1468, %v1472
    %v1477 = vand.u32 2147483647, %v1467
    %vm1478 = vcmp.eq.f32.partialorder %v1477, 8.507059e+37
    %v1479 = vand.u32 %v1467, 2147483648
    %v1480 = vor.u32 1.1754944e-38, %v1479
    %v1481 = vsel %vm1478, %v1480, %v1476
    %v1482 = vmul.f32 1.0, %v1481
    %v1483 = vxor.u32 %v1461, 2147483648
    %v1484 = vmul.f32 %v1483, 1.442695
    %v1485 = vpow.pop %v1484
    %v1486 = vadd.f32 %v1485, 1.0
    %v1487 = vrcp.pop %v1486
    %v1488 = vmul.f32 %v1486, %v1487
    %v1489 = vsub.f32 1.0, %v1488
    %v1490 = vmul.f32 %v1487, %v1489
    %v1491 = vadd.f32 %v1487, %v1490
    %vm1492 = vweird.f32 %v1486
    %vm1493 = vweird.f32 %v1487
    %vm1494 = vmor %vm1492, %vm1493
    %v1495 = vsel %vm1494, %v1487, %v1491
    %v1496 = vand.u32 2147483647, %v1486
    %vm1497 = vcmp.eq.f32.partialorder %v1496, 8.507059e+37
    %v1498 = vand.u32 %v1486, 2147483648
    %v1499 = vor.u32 1.1754944e-38, %v1498
    %v1500 = vsel %vm1497, %v1499, %v1495
    %v1501 = vmul.f32 1.0, %v1500
    %v1502 = vtanh.pop %v1462
    %v1503 = vxor.u32 %v1463, 2147483648
    %v1504 = vmul.f32 %v1503, 1.442695
    %v1505 = vpow.pop %v1504
    %v1506 = vadd.f32 %v1505, 1.0
    %v1507 = vrcp.pop %v1506
    %v1508 = vmul.f32 %v1506, %v1507
    %v1509 = vsub.f32 1.0, %v1508
    %v1510 = vmul.f32 %v1507, %v1509
    %v1511 = vadd.f32 %v1507, %v1510
    %vm1512 = vweird.f32 %v1506
    %vm1513 = vweird.f32 %v1507
    %vm1514 = vmor %vm1512, %vm1513
    %v1515 = vsel %vm1514, %v1507, %v1511
    %v1516 = vand.u32 2147483647, %v1506
    %vm1517 = vcmp.eq.f32.partialorder %v1516, 8.507059e+37
    %v1518 = vand.u32 %v1506, 2147483648
    %v1519 = vor.u32 1.1754944e-38, %v1518
    %v1520 = vsel %vm1517, %v1519, %v1515
    %v1521 = vmul.f32 1.0, %v1520
    %v1522 = vmul.f32 %v1501, %v1370
    %v1523 = vmul.f32 %v1482, %v1502
    %v1524 = vadd.f32 %v1522, %v1523
    %v1525 = vtanh.pop %v1524
    %v1526 = vmul.f32 %v1521, %v1525
    %s1527 = smul.u32 7, 4
    %s1528 = smul.addr %s1527, 8
    %s1529 = scalar_lea.vmem [#allocation2], %s1528
    %v1530 = vld [vmem:[%s1529] sm:$0xff]
    %v1531 = vld [vmem:[%s1529 + $0x8] sm:$0xff]
    %v1532 = vld [vmem:[%s1529 + $0x10] sm:$0xff]
    %v1533 = vld [vmem:[%s1529 + $0x18] sm:$0xff]
    %1534 = vmatpush.msra.mxu0 %v452
    %1535 = vmatpush.msra.mxu0 %v448
    %1536 = vmatpush.msra.mxu0 %v444
    %1537 = vmatpush.msra.mxu0 %v440
    %1538 = vmatpush.msra.mxu0 %v436
    %1539 = vmatpush.msra.mxu0 %v432
    %1540 = vmatpush.msra.mxu0 %v428
    %1541 = vmatpush.msra.mxu0 %v424
    %1542 = vmatpush.msra.mxu0 %v420
    %1543 = vmatpush.msra.mxu0 %v416
    %1544 = vmatpush.msra.mxu0 %v412
    %1545 = vmatpush.msra.mxu0 %v408
    %1546 = vmatpush.msra.mxu0 %v404
    %1547 = vmatpush.msra.mxu0 %v400
    %1548 = vmatpush.msra.mxu0 %v396
    %1549 = vmatpush.msra.mxu0 %v392
    %1550 = vmatmul.f32.gmra.mxu0 %v1526
    %v1551 = vpop.f32.mrf.mxu0
    %v1552 = vadd.f32 0.0, %v1551
    %1553 = vdwg.mxu0
    %1554 = vmatpush.msra.mxu0 %v453
    %1555 = vmatpush.msra.mxu0 %v449
    %1556 = vmatpush.msra.mxu0 %v445
    %1557 = vmatpush.msra.mxu0 %v441
    %1558 = vmatpush.msra.mxu0 %v437
    %1559 = vmatpush.msra.mxu0 %v433
    %1560 = vmatpush.msra.mxu0 %v429
    %1561 = vmatpush.msra.mxu0 %v425
    %1562 = vmatpush.msra.mxu0 %v421
    %1563 = vmatpush.msra.mxu0 %v417
    %1564 = vmatpush.msra.mxu0 %v413
    %1565 = vmatpush.msra.mxu0 %v409
    %1566 = vmatpush.msra.mxu0 %v405
    %1567 = vmatpush.msra.mxu0 %v401
    %1568 = vmatpush.msra.mxu0 %v397
    %1569 = vmatpush.msra.mxu0 %v393
    %1570 = vmatmul.f32.gmra.mxu0 %v1526
    %v1571 = vpop.f32.mrf.mxu0
    %v1572 = vadd.f32 0.0, %v1571
    %1573 = vdwg.mxu0
    %1574 = vmatpush.msra.mxu0 %v454
    %1575 = vmatpush.msra.mxu0 %v450
    %1576 = vmatpush.msra.mxu0 %v446
    %1577 = vmatpush.msra.mxu0 %v442
    %1578 = vmatpush.msra.mxu0 %v438
    %1579 = vmatpush.msra.mxu0 %v434
    %1580 = vmatpush.msra.mxu0 %v430
    %1581 = vmatpush.msra.mxu0 %v426
    %1582 = vmatpush.msra.mxu0 %v422
    %1583 = vmatpush.msra.mxu0 %v418
    %1584 = vmatpush.msra.mxu0 %v414
    %1585 = vmatpush.msra.mxu0 %v410
    %1586 = vmatpush.msra.mxu0 %v406
    %1587 = vmatpush.msra.mxu0 %v402
    %1588 = vmatpush.msra.mxu0 %v398
    %1589 = vmatpush.msra.mxu0 %v394
    %1590 = vmatmul.f32.gmra.mxu0 %v1526
    %v1591 = vpop.f32.mrf.mxu0
    %v1592 = vadd.f32 0.0, %v1591
    %1593 = vdwg.mxu0
    %1594 = vmatpush.msra.mxu0 %v455
    %1595 = vmatpush.msra.mxu0 %v451
    %1596 = vmatpush.msra.mxu0 %v447
    %1597 = vmatpush.msra.mxu0 %v443
    %1598 = vmatpush.msra.mxu0 %v439
    %1599 = vmatpush.msra.mxu0 %v435
    %1600 = vmatpush.msra.mxu0 %v431
    %1601 = vmatpush.msra.mxu0 %v427
    %1602 = vmatpush.msra.mxu0 %v423
    %1603 = vmatpush.msra.mxu0 %v419
    %1604 = vmatpush.msra.mxu0 %v415
    %1605 = vmatpush.msra.mxu0 %v411
    %1606 = vmatpush.msra.mxu0 %v407
    %1607 = vmatpush.msra.mxu0 %v403
    %1608 = vmatpush.msra.mxu0 %v399
    %1609 = vmatpush.msra.mxu0 %v395
    %1610 = vmatmul.f32.gmra.mxu0 %v1526
    %v1611 = vpop.f32.mrf.mxu0
    %v1612 = vadd.f32 0.0, %v1611
    %1613 = vdwg.mxu0
    %v1614 = vadd.f32 %v1530, %v1552
    %v1615 = vadd.f32 %v1531, %v1572
    %v1616 = vadd.f32 %v1532, %v1592
    %v1617 = vadd.f32 %v1533, %v1612
    %v1618 = vxor.u32 %v1614, 2147483648
    %v1619 = vmul.f32 %v1618, 1.442695
    %v1620 = vpow.pop %v1619
    %v1621 = vadd.f32 %v1620, 1.0
    %v1622 = vrcp.pop %v1621
    %v1623 = vmul.f32 %v1621, %v1622
    %v1624 = vsub.f32 1.0, %v1623
    %v1625 = vmul.f32 %v1622, %v1624
    %v1626 = vadd.f32 %v1622, %v1625
    %vm1627 = vweird.f32 %v1621
    %vm1628 = vweird.f32 %v1622
    %vm1629 = vmor %vm1627, %vm1628
    %v1630 = vsel %vm1629, %v1622, %v1626
    %v1631 = vand.u32 2147483647, %v1621
    %vm1632 = vcmp.eq.f32.partialorder %v1631, 8.507059e+37
    %v1633 = vand.u32 %v1621, 2147483648
    %v1634 = vor.u32 1.1754944e-38, %v1633
    %v1635 = vsel %vm1632, %v1634, %v1630
    %v1636 = vmul.f32 1.0, %v1635
    %v1637 = vxor.u32 %v1615, 2147483648
    %v1638 = vmul.f32 %v1637, 1.442695
    %v1639 = vpow.pop %v1638
    %v1640 = vadd.f32 %v1639, 1.0
    %v1641 = vrcp.pop %v1640
    %v1642 = vmul.f32 %v1640, %v1641
    %v1643 = vsub.f32 1.0, %v1642
    %v1644 = vmul.f32 %v1641, %v1643
    %v1645 = vadd.f32 %v1641, %v1644
    %vm1646 = vweird.f32 %v1640
    %vm1647 = vweird.f32 %v1641
    %vm1648 = vmor %vm1646, %vm1647
    %v1649 = vsel %vm1648, %v1641, %v1645
    %v1650 = vand.u32 2147483647, %v1640
    %vm1651 = vcmp.eq.f32.partialorder %v1650, 8.507059e+37
    %v1652 = vand.u32 %v1640, 2147483648
    %v1653 = vor.u32 1.1754944e-38, %v1652
    %v1654 = vsel %vm1651, %v1653, %v1649
    %v1655 = vmul.f32 1.0, %v1654
    %v1656 = vtanh.pop %v1616
    %v1657 = vxor.u32 %v1617, 2147483648
    %v1658 = vmul.f32 %v1657, 1.442695
    %v1659 = vpow.pop %v1658
    %v1660 = vadd.f32 %v1659, 1.0
    %v1661 = vrcp.pop %v1660
    %v1662 = vmul.f32 %v1660, %v1661
    %v1663 = vsub.f32 1.0, %v1662
    %v1664 = vmul.f32 %v1661, %v1663
    %v1665 = vadd.f32 %v1661, %v1664
    %vm1666 = vweird.f32 %v1660
    %vm1667 = vweird.f32 %v1661
    %vm1668 = vmor %vm1666, %vm1667
    %v1669 = vsel %vm1668, %v1661, %v1665
    %v1670 = vand.u32 2147483647, %v1660
    %vm1671 = vcmp.eq.f32.partialorder %v1670, 8.507059e+37
    %v1672 = vand.u32 %v1660, 2147483648
    %v1673 = vor.u32 1.1754944e-38, %v1672
    %v1674 = vsel %vm1671, %v1673, %v1669
    %v1675 = vmul.f32 1.0, %v1674
    %v1676 = vmul.f32 %v1655, %v1524
    %v1677 = vmul.f32 %v1636, %v1656
    %v1678 = vadd.f32 %v1676, %v1677
    %v1679 = vtanh.pop %v1678
    %v1680 = vmul.f32 %v1675, %v1679
    %v1681 = vld [vmem:[#allocation7] sm:$0xff]
    %v1682 = vld [vmem:[#allocation7 + $0x8] sm:$0xff]
    %v1683 = vld [vmem:[#allocation7 + $0x10] sm:$0xff]
    %v1684 = vld [vmem:[#allocation7 + $0x18] sm:$0xff]
    %v1685 = vld [vmem:[#allocation7 + $0x20] sm:$0xff]
    %v1686 = vld [vmem:[#allocation7 + $0x28] sm:$0xff]
    %v1687 = vld [vmem:[#allocation7 + $0x30] sm:$0xff]
    %v1688 = vld [vmem:[#allocation7 + $0x38] sm:$0xff]
    %v1689 = vld [vmem:[#allocation7 + $0x40] sm:$0xff]
    %v1690 = vld [vmem:[#allocation7 + $0x48] sm:$0xff]
    %v1691 = vld [vmem:[#allocation7 + $0x50] sm:$0xff]
    %v1692 = vld [vmem:[#allocation7 + $0x58] sm:$0xff]
    %v1693 = vld [vmem:[#allocation7 + $0x60] sm:$0xff]
    %v1694 = vld [vmem:[#allocation7 + $0x68] sm:$0xff]
    %v1695 = vld [vmem:[#allocation7 + $0x70] sm:$0xff]
    %v1696 = vld [vmem:[#allocation7 + $0x78] sm:$0xff]
    %v1697 = vld [vmem:[%s4] sm:$0x1]
    %v1699 = vperm.slane %v1697, 0
    %1701 = vmatpush.msra.mxu0 %v1696
    %1702 = vmatpush.msra.mxu0 %v1695
    %1703 = vmatpush.msra.mxu0 %v1694
    %1704 = vmatpush.msra.mxu0 %v1693
    %1705 = vmatpush.msra.mxu0 %v1692
    %1706 = vmatpush.msra.mxu0 %v1691
    %1707 = vmatpush.msra.mxu0 %v1690
    %1708 = vmatpush.msra.mxu0 %v1689
    %1709 = vmatpush.msra.mxu0 %v1688
    %1710 = vmatpush.msra.mxu0 %v1687
    %1711 = vmatpush.msra.mxu0 %v1686
    %1712 = vmatpush.msra.mxu0 %v1685
    %1713 = vmatpush.msra.mxu0 %v1684
    %1714 = vmatpush.msra.mxu0 %v1683
    %1715 = vmatpush.msra.mxu0 %v1682
    %1716 = vmatpush.msra.mxu0 %v1681
    %1717 = vmatmul.f32.gmra.mxu0 %v1680
    %v1718 = vpop.f32.mrf.mxu0
    %v1719 = vadd.f32 %v1699, %v1718
    %1720 = vdwg.mxu0
    %1721 = vst [vmem:[%s5] sm:$0xff] %v1719
    // Predicated region
    $region34: #{simple_llm_forward.1} parent=1 // pred_check
      _
    $region35: #{simple_llm_forward.1} parent=1 // pred_check_branch
      %1723 = sbr.rel (0) target = $region37
    $region36: #{simple_llm_forward.1} parent=1 // pred_region
      _
    $region37: #{simple_llm_forward.1} parent=1 // pred_fallthru
      _
    // Predicated region
    $region38: #{simple_llm_forward.1} parent=1 // pred_check
      _
    $region39: #{simple_llm_forward.1} parent=1 // pred_check_branch
      %1725 = sbr.rel (0) target = $region41
    $region40: #{simple_llm_forward.1} parent=1 // pred_region
      _
    $region41: #{simple_llm_forward.1} parent=1 // pred_fallthru
      _
    %1726 = vsyncpa [#allocation4], 1
    %1727 = vsyncpa [#allocation6], 1

</llo_original>
